<compile_context>
chip_gen: v7x
topology: tpu7x:2x2x1
jax: 0.10.0
libtpu: 0.0.40
codegen_flags: <defaults>
</compile_context>

<pallas_src>
import functools
import numpy as np
import jax
import jax.numpy as jnp
from jax import lax
from jax.experimental import pallas as pl
from jax.experimental.pallas import tpu as pltpu

EPS = 1e-06


def _round_up(x, m):
    return ((x + m - 1) // m) * m


def _shrink_tile(t):
    return max(128, (t // 2 // 128) * 128)


def _tpu_generation():
    kind = ""
    try:
        kind = (jax.devices()[0].device_kind or "").lower()
    except Exception:
        pass
    if "v7" in kind:
        return "v7x"
    if "v6" in kind:
        return "v6e"
    if "v5" in kind:
        return "v5"
    return "other"


def _hw_config():
    gen = _tpu_generation()
    if gen == "v7x":
        # 64 MiB VMEM / TC, 2 TensorCores: conservative tiles, leave DMA headroom.
        cfg = dict(gen=gen, compute_dtype=jnp.bfloat16, t_tile=256, g_tile=512,
                   vmem_limit=48 * 1024 * 1024, temp_budget=12 * 1024 * 1024,
                   two_cores=True)
    elif gen == "v6e":
        cfg = dict(gen=gen, compute_dtype=jnp.bfloat16, t_tile=512, g_tile=512,
                   vmem_limit=80 * 1024 * 1024, temp_budget=24 * 1024 * 1024,
                   two_cores=False)
    elif gen == "v5":
        # 128 MiB VMEM but no bf16 VPU/EUP: big tiles, keep f32 compute.
        cfg = dict(gen=gen, compute_dtype=jnp.float32, t_tile=512, g_tile=512,
                   vmem_limit=80 * 1024 * 1024, temp_budget=24 * 1024 * 1024,
                   two_cores=False)
    else:
        # Unknown generation (e.g. v4 / interpreter): conservative f32 defaults.
        cfg = dict(gen=gen, compute_dtype=jnp.float32, t_tile=256, g_tile=256,
                   vmem_limit=48 * 1024 * 1024, temp_budget=12 * 1024 * 1024,
                   two_cores=False)
    try:
        cap = int(pltpu.get_tpu_info().vmem_capacity_bytes)
        cfg["vmem_limit"] = min(cfg["vmem_limit"], (cap * 3) // 4)
    except Exception:
        pass
    return cfg


def _final_layer_kernel(x_ref, tx_ref, h_ref, coeff_ref, o_ref, *,
                        nbasis, compute_dtype):
    # x_ref:     (C, Gt)     grid coordinates, G on lanes
    # tx_ref:    (C, Tt)     target coordinates, T on lanes (Tt multiple of 128)
    # h_ref:     (K, C, Gt)  grid features, G on lanes
    # coeff_ref: (K, C)      -0.5 / (exp(sigma) + eps)^2
    # o_ref:     (K, C, Tt)  output block, VMEM-resident across the G grid axis
    @pl.when(pl.program_id(2) == 0)
    def _():
        o_ref[...] = jnp.zeros_like(o_ref)

    x = x_ref[...]                                    # (C, Gt)
    tx = tx_ref[...]                                  # (C, Tt)

    # d2[c, t, g]: T on sublanes, G on lanes.  Computed ONCE per block and shared by
    # every basis k; x / h broadcast along sublanes (cheap), only the small tx tile
    # pays a lane->sublane relayout.
    diff = tx[:, :, None] - x[:, None, :]             # (C, Tt, Gt)
    d2 = (diff * diff).astype(compute_dtype)          # exp-argument dtype (bf16 on v6e/v7x)

    def accumulate(k):
        coeff_k = coeff_ref[k].astype(compute_dtype)                    # (C,)
        wt = jnp.exp(coeff_k[:, None, None] * d2)                       # (C, Tt, Gt) EUP-bound
        h_k = h_ref[k].astype(compute_dtype)                            # (C, Gt)
        # f32 accumulation over the lane (G) axis; no full-size f32 upcast of the
        # product slab is kept live.
        part = jnp.sum(h_k[:, None, :] * wt, axis=-1, dtype=jnp.float32)  # (C, Tt)
        o_ref[k] = o_ref[k] + part

    if nbasis <= 8:
        # Small K: static (fully unrolled) loop -> static indices, best scheduling.
        for k in range(nbasis):
            accumulate(k)
    else:
        # Large K: real loop so only one per-basis slab is live at a time.
        def body(k, carry):
            accumulate(k)
            return carry
        lax.fori_loop(0, nbasis, body, None)


def final_layer_forward(x_grid, h_grid, target_x, sigma, *,
                        compute_dtype=None, t_tile=None, g_tile=None,
                        vmem_limit_bytes=None):
    """Pallas implementation of FinalLayer.forward.

    Args:
      x_grid:   (nb, ngrid, nchannel)            float32
      h_grid:   (nb, ngrid, nbasis, in_channels) float32
      target_x: (nb, ntarget, nchannel)          float32
      sigma:    (nbasis, in_channels)            float32 (log length-scales)

    Returns:
      (nb, ntarget, nbasis, in_channels) float32
    """
    nb, ngrid, nchannel = x_grid.shape
    _, ntarget, _ = target_x.shape
    _, _, nbasis, in_channels = h_grid.shape
    assert nchannel == in_channels
    assert sigma.shape == (nbasis, in_channels)

    cfg = _hw_config()
    if compute_dtype is None:
        compute_dtype = cfg["compute_dtype"]
    if vmem_limit_bytes is None:
        vmem_limit_bytes = cfg["vmem_limit"]

    # Fold exp(sigma), eps and the -0.5 into one per-(k, c) coefficient (done once).
    scales = jnp.exp(sigma.astype(jnp.float32))
    coeff = (-0.5 / jnp.square(scales + EPS)).astype(jnp.float32)       # (K, C)

    # ---- tile selection (generation-aware, temp-budget bounded) ----
    itemsize = jnp.dtype(compute_dtype).itemsize
    tt = t_tile if t_tile is not None else min(cfg["t_tile"], _round_up(ntarget, 128))
    gt = g_tile if g_tile is not None else min(cfg["g_tile"], _round_up(ngrid, 128))
    tt = _round_up(tt, 128)
    gt = _round_up(gt, 128)

    def live_bytes(t, g):
        # ~3 live (C, t, g) compute-dtype slabs (d2, wt, product) inside the k-loop.
        return 3 * in_channels * t * g * itemsize

    if t_tile is None and g_tile is None:
        while live_bytes(tt, gt) > cfg["temp_budget"] and gt > 128:
            gt = _shrink_tile(gt)
        while live_bytes(tt, gt) > cfg["temp_budget"] and tt > 128:
            tt = _shrink_tile(tt)

    if cfg["two_cores"]:
        # v7x: make sure the two TensorCores both get work on the parallel grid axes.
        while nb * (_round_up(ntarget, tt) // tt) < 2 and tt > 128:
            tt = _shrink_tile(tt)

    t_pad = _round_up(max(ntarget, 1), tt)
    g_pad = _round_up(max(ngrid, 1), gt)

    # ---- layout: G (grid points) on lanes everywhere; output lane-dense in T ----
    x_t = jnp.transpose(x_grid, (0, 2, 1)).astype(jnp.float32)          # (nb, C, G)
    tx_t = jnp.transpose(target_x, (0, 2, 1)).astype(jnp.float32)       # (nb, C, T)
    h_t = jnp.transpose(h_grid, (0, 2, 3, 1)).astype(jnp.float32)       # (nb, K, C, G)
    # TODO(synk): the h transpose is one extra HBM pass over the largest input; it
    # could be read in its native (G, K, C) layout when in_channels >= 128.

    if g_pad != ngrid:
        x_t = jnp.pad(x_t, ((0, 0), (0, 0), (0, g_pad - ngrid)))
        h_t = jnp.pad(h_t, ((0, 0), (0, 0), (0, 0), (0, g_pad - ngrid)))  # zero h => no contribution
    if t_pad != ntarget:
        tx_t = jnp.pad(tx_t, ((0, 0), (0, 0), (0, t_pad - ntarget)))

    grid = (nb, t_pad // tt, g_pad // gt)

    kernel = functools.partial(_final_layer_kernel, nbasis=nbasis,
                               compute_dtype=compute_dtype)

    out_t = pl.pallas_call(
        kernel,
        out_shape=jax.ShapeDtypeStruct((nb, nbasis, in_channels, t_pad), jnp.float32),
        grid_spec=pltpu.PrefetchScalarGridSpec(
            num_scalar_prefetch=0,
            grid=grid,
            in_specs=[
                # x: (nb, C, G_pad) -> (C, g_tile)
                pl.BlockSpec((None, in_channels, gt), lambda b, t, g: (b, 0, g)),
                # target_x: (nb, C, T_pad) -> (C, t_tile)
                pl.BlockSpec((None, in_channels, tt), lambda b, t, g: (b, 0, t)),
                # h: (nb, K, C, G_pad) -> (K, C, g_tile)
                pl.BlockSpec((None, nbasis, in_channels, gt),
                             lambda b, t, g: (b, 0, 0, g)),
                # coeff: (K, C), full block
                pl.BlockSpec((nbasis, in_channels), lambda b, t, g: (0, 0)),
            ],
            out_specs=pl.BlockSpec((None, nbasis, in_channels, tt),
                                   lambda b, t, g: (b, 0, 0, t)),
        ),
        compiler_params=pltpu.CompilerParams(
            dimension_semantics=("parallel", "parallel", "arbitrary"),
            vmem_limit_bytes=int(vmem_limit_bytes),
        ),
    )(x_t, tx_t, h_t, coeff)

    # (nb, K, C, T_pad) -> (nb, T, K, C) to match the PyTorch module's output.
    # TODO(synk): skip this transpose if the consumer accepts the (nb, K, C, T) layout.
    return jnp.transpose(out_t[:, :, :, :ntarget], (0, 3, 1, 2))


def final_layer_reference(x_grid, h_grid, target_x, sigma):
    """Pure-JAX reference matching the PyTorch forward exactly."""
    nbasis = h_grid.shape[2]
    dists = x_grid[:, :, None, :] - target_x[:, None, :, :]             # (nb, G, T, C)
    dists = jnp.repeat(dists[:, :, :, None, :], nbasis, axis=3)         # (nb, G, T, K, C)
    scales = jnp.exp(sigma)[None, None, None, :, :]
    wt = jnp.exp(-0.5 * (dists / (scales + EPS)) ** 2)                  # (nb, G, T, K, C)
    h = h_grid[:, :, None, :, :]                                        # (nb, G, 1, K, C)
    return jnp.sum(h * wt, axis=1)                                      # (nb, T, K, C)


if __name__ == "__main__":
    # Small shapes consistent with the module's forward.
    nb, ngrid, ntarget = 2, 16, 8
    nbasis, in_channels = 2, 4
    init_lengthscale, min_init_lengthscale = 1.0, 1e-06

    key = jax.random.PRNGKey(0)
    k1, k2, k3, k4, k5, k6 = jax.random.split(key, 6)
    x_grid = jax.random.normal(k1, (nb, ngrid, in_channels), dtype=jnp.float32)
    h_grid = jax.random.normal(k2, (nb, ngrid, nbasis, in_channels), dtype=jnp.float32)
    target_x = jax.random.normal(k3, (nb, ntarget, in_channels), dtype=jnp.float32)

    # Deterministic parameter init, identical to the PyTorch module's __init__.
    sigma = jnp.log(min_init_lengthscale
                    + init_lengthscale * jnp.ones((nbasis, in_channels), dtype=jnp.float32))

    ref = final_layer_reference(x_grid, h_grid, target_x, sigma)

    # 1) Numerically-faithful f32 path.
    out = final_layer_forward(x_grid, h_grid, target_x, sigma, compute_dtype=jnp.float32)
    out = jax.block_until_ready(out)
    np.testing.assert_allclose(np.asarray(out), np.asarray(ref), rtol=1e-4, atol=1e-4)

    # 2) Generation-dispatched defaults (bf16 exp on v6e/v7x, f32 elsewhere).
    out_auto = final_layer_forward(x_grid, h_grid, target_x, sigma)
    out_auto = jax.block_until_ready(out_auto)
    np.testing.assert_allclose(np.asarray(out_auto), np.asarray(ref), rtol=1e-1, atol=1e-1)

    # 3) Larger, padded, multi-tile case exercising the streamed-G reduction,
    #    batch squeeze (nb=1), non-multiple-of-128 G/T and odd channel count.
    nb2, ngrid2, ntarget2, nbasis2, c2 = 1, 700, 300, 3, 5
    x2 = jax.random.normal(k4, (nb2, ngrid2, c2), dtype=jnp.float32)
    h2 = jax.random.normal(k5, (nb2, ngrid2, nbasis2, c2), dtype=jnp.float32)
    t2 = jax.random.normal(k6, (nb2, ntarget2, c2), dtype=jnp.float32)
    sigma2 = jnp.log(min_init_lengthscale
                     + init_lengthscale * jnp.ones((nbasis2, c2), dtype=jnp.float32))
    out2 = final_layer_forward(x2, h2, t2, sigma2, compute_dtype=jnp.float32,
                               t_tile=128, g_tile=256)
    out2 = jax.block_until_ready(out2)
    ref2 = final_layer_reference(x2, h2, t2, sigma2)
    np.testing.assert_allclose(np.asarray(out2), np.asarray(ref2), rtol=1e-3, atol=1e-3)

    print("KERNEL_OK")
</pallas_src>

<mosaic_0001>
module attributes {stable_mosaic.version = 11 : i64} {
  func.func @_final_layer_kernel(%arg0: i32, %arg1: i32, %arg2: i32, %arg3: memref<1x4x128xf32, #tpu.memory_space<vmem>>, %arg4: memref<1x4x128xf32, #tpu.memory_space<vmem>>, %arg5: memref<1x2x4x128xf32, #tpu.memory_space<vmem>>, %arg6: memref<2x4xf32, #tpu.memory_space<vmem>>, %arg7: memref<1x2x4x128xf32, #tpu.memory_space<vmem>>) attributes {dimension_semantics = [#tpu.dimension_semantics<parallel>, #tpu.dimension_semantics<parallel>, #tpu.dimension_semantics<arbitrary>], iteration_bounds = array<i64: 2, 1, 1>, scalar_prefetch = 0 : i64, scratch_operands = 0 : i64, tpu.core_type = #tpu.core_type<tc>, window_params = [{transform_indices = @transform_0, window_bounds = array<i64: 1, 4, 128>}, {transform_indices = @transform_1, window_bounds = array<i64: 1, 4, 128>}, {transform_indices = @transform_2, window_bounds = array<i64: 1, 2, 4, 128>}, {pipeline_mode = #tpu.pipeline_mode<synchronous>, transform_indices = @transform_3, window_bounds = array<i64: 2, 4>}, {transform_indices = @transform_4, window_bounds = array<i64: 1, 2, 4, 128>}]} {
    %c0_i32 = arith.constant 0 : i32
    %0 = arith.cmpi eq, %arg2, %c0_i32 : i32
    %1 = arith.extui %0 : i1 to i32
    %c0_i32_0 = arith.constant 0 : i32
    %2 = arith.cmpi ne, %1, %c0_i32_0 : i32
    scf.if %2 {
      %cst_34 = arith.constant 0.000000e+00 : f32
      %49 = vector.broadcast %cst_34 : f32 to vector<2x4x128xf32>
      %c0_35 = arith.constant 0 : index
      %c0_36 = arith.constant 0 : index
      %c0_37 = arith.constant 0 : index
      %c0_38 = arith.constant 0 : index
      %50 = vector.load %arg7[%c0_35, %c0_36, %c0_37, %c0_38] : memref<1x2x4x128xf32, #tpu.memory_space<vmem>>, vector<1x2x4x128xf32>
      %51 = vector.shape_cast %50 : vector<1x2x4x128xf32> to vector<2x4x128xf32>
      %52 = vector.shape_cast %49 : vector<2x4x128xf32> to vector<1x2x4x128xf32>
      tpu.vector_store %arg7[%c0_35, %c0_36, %c0_37, %c0_38], %52 {strides = array<i32>} : memref<1x2x4x128xf32, #tpu.memory_space<vmem>>, vector<1x2x4x128xf32>,
    } else {
    }
    %c0 = arith.constant 0 : index
    %c0_1 = arith.constant 0 : index
    %c0_2 = arith.constant 0 : index
    %3 = vector.load %arg3[%c0, %c0_1, %c0_2] : memref<1x4x128xf32, #tpu.memory_space<vmem>>, vector<1x4x128xf32>
    %4 = vector.shape_cast %3 : vector<1x4x128xf32> to vector<4x128xf32>
    %c0_3 = arith.constant 0 : index
    %c0_4 = arith.constant 0 : index
    %c0_5 = arith.constant 0 : index
    %5 = vector.load %arg4[%c0_3, %c0_4, %c0_5] : memref<1x4x128xf32, #tpu.memory_space<vmem>>, vector<1x4x128xf32>
    %6 = vector.shape_cast %5 : vector<1x4x128xf32> to vector<4x128xf32>
    %7 = vector.shape_cast %6 : vector<4x128xf32> to vector<4x128x1xf32>
    %8 = vector.shape_cast %4 : vector<4x128xf32> to vector<4x1x128xf32>
    %9 = vector.broadcast %7 : vector<4x128x1xf32> to vector<4x128x128xf32>
    %10 = vector.broadcast %8 : vector<4x1x128xf32> to vector<4x128x128xf32>
    %11 = arith.subf %9, %10 : vector<4x128x128xf32>
    %12 = arith.mulf %11, %11 : vector<4x128x128xf32>
    %c0_6 = arith.constant 0 : index
    %c0_7 = arith.constant 0 : index
    %13 = vector.load %arg6[%c0_6, %c0_7] : memref<2x4xf32, #tpu.memory_space<vmem>>, vector<1x4xf32>
    %14 = vector.shape_cast %13 : vector<1x4xf32> to vector<4xf32>
    %15 = vector.shape_cast %14 : vector<4xf32> to vector<4x1x1xf32>
    %16 = vector.broadcast %15 : vector<4x1x1xf32> to vector<4x128x128xf32>
    %17 = arith.mulf %16, %12 : vector<4x128x128xf32>
    %18 = math.exp %17 : vector<4x128x128xf32>
    %c0_8 = arith.constant 0 : index
    %c0_9 = arith.constant 0 : index
    %c0_10 = arith.constant 0 : index
    %c0_11 = arith.constant 0 : index
    %19 = vector.load %arg5[%c0_8, %c0_9, %c0_10, %c0_11] : memref<1x2x4x128xf32, #tpu.memory_space<vmem>>, vector<1x1x4x128xf32>
    %20 = vector.shape_cast %19 : vector<1x1x4x128xf32> to vector<4x128xf32>
    %21 = vector.shape_cast %20 : vector<4x128xf32> to vector<4x1x128xf32>
    %22 = vector.broadcast %21 : vector<4x1x128xf32> to vector<4x128x128xf32>
    %23 = arith.mulf %22, %18 : vector<4x128x128xf32>
    %cst = arith.constant dense<0.000000e+00> : vector<4x128xf32>
    %24 = vector.multi_reduction <add>, %23, %cst [2] : vector<4x128x128xf32> to vector<4x128xf32>
    %c0_12 = arith.constant 0 : index
    %c0_13 = arith.constant 0 : index
    %c0_14 = arith.constant 0 : index
    %c0_15 = arith.constant 0 : index
    %25 = vector.load %arg7[%c0_12, %c0_13, %c0_14, %c0_15] : memref<1x2x4x128xf32, #tpu.memory_space<vmem>>, vector<1x1x4x128xf32>
    %26 = vector.shape_cast %25 : vector<1x1x4x128xf32> to vector<4x128xf32>
    %27 = arith.addf %26, %24 : vector<4x128xf32>
    %c0_16 = arith.constant 0 : index
    %c0_17 = arith.constant 0 : index
    %c0_18 = arith.constant 0 : index
    %c0_19 = arith.constant 0 : index
    %28 = vector.load %arg7[%c0_16, %c0_17, %c0_18, %c0_19] : memref<1x2x4x128xf32, #tpu.memory_space<vmem>>, vector<1x1x4x128xf32>
    %29 = vector.shape_cast %28 : vector<1x1x4x128xf32> to vector<4x128xf32>
    %30 = vector.shape_cast %27 : vector<4x128xf32> to vector<1x1x4x128xf32>
    tpu.vector_store %arg7[%c0_16, %c0_17, %c0_18, %c0_19], %30 {strides = array<i32>} : memref<1x2x4x128xf32, #tpu.memory_space<vmem>>, vector<1x1x4x128xf32>,
    %c1 = arith.constant 1 : index
    %c0_20 = arith.constant 0 : index
    %31 = vector.load %arg6[%c1, %c0_20] : memref<2x4xf32, #tpu.memory_space<vmem>>, vector<1x4xf32>
    %32 = vector.shape_cast %31 : vector<1x4xf32> to vector<4xf32>
    %33 = vector.shape_cast %32 : vector<4xf32> to vector<4x1x1xf32>
    %34 = vector.broadcast %33 : vector<4x1x1xf32> to vector<4x128x128xf32>
    %35 = arith.mulf %34, %12 : vector<4x128x128xf32>
    %36 = math.exp %35 : vector<4x128x128xf32>
    %c0_21 = arith.constant 0 : index
    %c1_22 = arith.constant 1 : index
    %c0_23 = arith.constant 0 : index
    %c0_24 = arith.constant 0 : index
    %37 = vector.load %arg5[%c0_21, %c1_22, %c0_23, %c0_24] : memref<1x2x4x128xf32, #tpu.memory_space<vmem>>, vector<1x1x4x128xf32>
    %38 = vector.shape_cast %37 : vector<1x1x4x128xf32> to vector<4x128xf32>
    %39 = vector.shape_cast %38 : vector<4x128xf32> to vector<4x1x128xf32>
    %40 = vector.broadcast %39 : vector<4x1x128xf32> to vector<4x128x128xf32>
    %41 = arith.mulf %40, %36 : vector<4x128x128xf32>
    %cst_25 = arith.constant dense<0.000000e+00> : vector<4x128xf32>
    %42 = vector.multi_reduction <add>, %41, %cst_25 [2] : vector<4x128x128xf32> to vector<4x128xf32>
    %c0_26 = arith.constant 0 : index
    %c1_27 = arith.constant 1 : index
    %c0_28 = arith.constant 0 : index
    %c0_29 = arith.constant 0 : index
    %43 = vector.load %arg7[%c0_26, %c1_27, %c0_28, %c0_29] : memref<1x2x4x128xf32, #tpu.memory_space<vmem>>, vector<1x1x4x128xf32>
    %44 = vector.shape_cast %43 : vector<1x1x4x128xf32> to vector<4x128xf32>
    %45 = arith.addf %44, %42 : vector<4x128xf32>
    %c0_30 = arith.constant 0 : index
    %c1_31 = arith.constant 1 : index
    %c0_32 = arith.constant 0 : index
    %c0_33 = arith.constant 0 : index
    %46 = vector.load %arg7[%c0_30, %c1_31, %c0_32, %c0_33] : memref<1x2x4x128xf32, #tpu.memory_space<vmem>>, vector<1x1x4x128xf32>
    %47 = vector.shape_cast %46 : vector<1x1x4x128xf32> to vector<4x128xf32>
    %48 = vector.shape_cast %45 : vector<4x128xf32> to vector<1x1x4x128xf32>
    tpu.vector_store %arg7[%c0_30, %c1_31, %c0_32, %c0_33], %48 {strides = array<i32>} : memref<1x2x4x128xf32, #tpu.memory_space<vmem>>, vector<1x1x4x128xf32>,
    return
  }
  func.func @transform_0(%arg0: i32, %arg1: i32, %arg2: i32) -> (i32, i32, i32) {
    %c0_i32 = arith.constant 0 : i32
    %c0_i32_0 = arith.constant 0 : i32
    return %arg0, %c0_i32, %arg2 : i32, i32, i32
  }
  func.func @transform_1(%arg0: i32, %arg1: i32, %arg2: i32) -> (i32, i32, i32) {
    %c0_i32 = arith.constant 0 : i32
    %c0_i32_0 = arith.constant 0 : i32
    return %arg0, %c0_i32, %arg1 : i32, i32, i32
  }
  func.func @transform_2(%arg0: i32, %arg1: i32, %arg2: i32) -> (i32, i32, i32, i32) {
    %c0_i32 = arith.constant 0 : i32
    %c0_i32_0 = arith.constant 0 : i32
    %c0_i32_1 = arith.constant 0 : i32
    return %arg0, %c0_i32, %c0_i32_0, %arg2 : i32, i32, i32, i32
  }
  func.func @transform_3(%arg0: i32, %arg1: i32, %arg2: i32) -> (i32, i32) {
    %c0_i32 = arith.constant 0 : i32
    %c0_i32_0 = arith.constant 0 : i32
    %c0_i32_1 = arith.constant 0 : i32
    return %c0_i32, %c0_i32_0 : i32, i32
  }
  func.func @transform_4(%arg0: i32, %arg1: i32, %arg2: i32) -> (i32, i32, i32, i32) {
    %c0_i32 = arith.constant 0 : i32
    %c0_i32_0 = arith.constant 0 : i32
    %c0_i32_1 = arith.constant 0 : i32
    return %arg0, %c0_i32, %c0_i32_0, %arg1 : i32, i32, i32, i32
  }
}

</mosaic_0001>

<llo_original>
// kernel: tpu_custom_call.1
$region0: #{tpu_custom_call.1}
  #allocation0 [shape = 'u32[]', space=smem, size = 0x4, offset = 0x4, fixed_abs, tag = 'smem constant byte address 0x4 - core index']
  #allocation1 [shape = 'u32[144,128]{1,0:T(1,128)}', space=vmem, size = 0x12000, scoped, tag = 'internal scratch']
  %s0 = inlined_call_operand.hbm [shape: f32[2,4,128], index: 0, kind: input, shape index: {}]
  %s1 = inlined_call_operand.hbm [shape: f32[2,4,128], index: 1, kind: input, shape index: {}]
  %s2 = inlined_call_operand.hbm [shape: f32[2,2,4,128], index: 2, kind: input, shape index: {}]
  %s3 = inlined_call_operand.vmem [shape: f32[2,4], index: 3, kind: input, shape index: {}]
  %s4 = inlined_call_operand.hbm [shape: f32[2,2,4,128], index: 4, kind: output, shape index: {}]
  %s5 = sld [smem:[#allocation0]]
  $region65: #{tpu_custom_call.1} parent=0
    _
  %s7 = ssub.s32 1, %s5
  %s8 = scalar_select 0, %s7, %s5
  $region1: #{tpu_custom_call.1} parent=0
    #allocation2 [shape = 'u8[4096]{0}', space=vmem, size = 0x1000, scoped, tag = 'input window, operand 0']
    #allocation3 [shape = 's32[2]{0}', space=sflag, size = 0x8, scoped, tag = 'scoped memory for tpu_custom_call.1']
    #allocation4 [shape = 's32[2]{0}', space=sflag, size = 0x8, scoped, tag = 'scoped memory for tpu_custom_call.1']
    #allocation5 [shape = 'u8[4096]{0}', space=vmem, size = 0x1000, scoped, tag = 'input window, operand 1']
    #allocation6 [shape = 's32[2]{0}', space=sflag, size = 0x8, scoped, tag = 'scoped memory for tpu_custom_call.1']
    #allocation7 [shape = 'u8[8192]{0}', space=vmem, size = 0x2000, scoped, tag = 'input window, operand 2']
    #allocation8 [shape = 'u8[8192]{0}', space=vmem, size = 0x2000, scoped, tag = 'output window, operand 0']
    %9 = vsyncpa [#allocation3], 0
    %s10 = scalar_lea.sflag [#allocation3], 1
    %11 = vsyncpa %s10, 0
    %12 = vsyncpa [#allocation6], 0
    %s13 = scalar_lea.sflag [#allocation6], 1
    %14 = vsyncpa %s13, 0
    %15 = vsyncpa [#allocation4], 0
    %s16 = scalar_lea.sflag [#allocation4], 1
    %17 = vsyncpa %s16, 0
    loop: start=0, step=1, limit=4
    $region2: #{tpu_custom_call.1} parent=1 // loop_pre_header
      _
    $region3: #{tpu_custom_call.1} parent=1 // loop_header
      %s19 = sphi 0, %s23
      %p20 = scmp.ge.s32.totalorder %s19, 4
      %s26 = sphi 0, %s45
      %s27 = sphi 0, %s41
      %s28 = sphi 0, %s37
      %s29 = sphi 0, %s26
      %s30 = sphi 0, %s27
      %s31 = sphi 0, %s28
      %s32 = sphi 0, %s29
      %s33 = sphi 0, %s30
      %s34 = sphi 0, %s31
      %s50 = sphi 0, %s52
      %s53 = sphi 0, %s50
      %s54 = sphi 0, %s53
      %s70 = sphi 0, %s54
      %s78 = sphi 0, %s80
      %s81 = sphi 0, %s78
      %s82 = sphi 0, %s81
      %s98 = sphi 0, %s82
      %s106 = sphi 0, %s108
      %s109 = sphi 0, %s106
      %s110 = sphi 0, %s109
      %s126 = sphi 0, %s110
      %s130 = sphi 0, %s130
      %s132 = sphi 0, %s130
      %s133 = sphi 0, %s132
      %s147 = sphi 0, %s133
      %s155 = sphi 0, %s157
      %s158 = sphi 0, %s155
      %s159 = sphi 0, %s158
      %s175 = sphi 0, %s159
    $region4: #{tpu_custom_call.1} parent=1 // loop_header_branch
      %22 = sbr.rel (%p20) target = $region8
    $region5: #{tpu_custom_call.1} parent=1 // loop_body
      %s24 = ssub.s32 %s19, 1
      %s25 = ssub.s32 %s19, 2
      %s35 = sadd.s32 1, %s28
      %p36 = scmp.ge.s32.totalorder %s35, 1
      %s37 = scalar_select %p36, 0, %s35
      %s38 = sadd.s32 1, %s27
      %s39 = scalar_select %p36, %s38, %s27
      %p40 = scmp.ge.s32.totalorder %s39, 1
      %s41 = scalar_select %p40, 0, %s39
      %s42 = sadd.s32 1, %s26
      %s43 = scalar_select %p40, %s42, %s26
      %p44 = scmp.ge.s32.totalorder %s43, 2
      %s45 = scalar_select %p44, 0, %s43
      %s46 = ssub.s32 %s26, %s45
      %s47 = ssub.s32 %s28, %s37
      %s48 = sor.u32 %s46, %s47
      %p49 = scmp.eq.s32.totalorder %s48, 0
      %s51 = sadd.s32 %s50, 1
      %s52 = scalar_select %p49, %s50, %s51
      %p55 = pneg %p49
      %p56 = scmp.eq.s32.totalorder %s19, 1
      %p57 = por %p55, %p56
      %p58 = scmp.ne.s32.totalorder %s50, %s53
      %p59 = scmp.eq.s32.totalorder %s19, 0
      %p60 = por %p58, %p59
      %p61 = scmp.ne.s32.totalorder %s50, %s53
      %p62 = scmp.eq.s32.totalorder %s24, 1
      %p63 = por %p61, %p62
      %p64 = scmp.ne.s32.totalorder %s53, %s54
      %p65 = scmp.eq.s32.totalorder %s24, 0
      %p66 = por %p64, %p65
      %p67 = scmp.ne.s32.totalorder %s53, %s54
      %p68 = scmp.eq.s32.totalorder %s25, 1
      %p69 = por %p67, %p68
      %p71 = scmp.ne.s32.totalorder %s54, %s70
      %p72 = scmp.eq.s32.totalorder %s25, 0
      %p73 = por %p71, %p72
      %s74 = ssub.s32 %s26, %s45
      %s75 = ssub.s32 %s27, %s41
      %s76 = sor.u32 %s74, %s75
      %p77 = scmp.eq.s32.totalorder %s76, 0
      %s79 = sadd.s32 %s78, 1
      %s80 = scalar_select %p77, %s78, %s79
      %p83 = pneg %p77
      %p84 = scmp.eq.s32.totalorder %s19, 1
      %p85 = por %p83, %p84
      %p86 = scmp.ne.s32.totalorder %s78, %s81
      %p87 = scmp.eq.s32.totalorder %s19, 0
      %p88 = por %p86, %p87
      %p89 = scmp.ne.s32.totalorder %s78, %s81
      %p90 = scmp.eq.s32.totalorder %s24, 1
      %p91 = por %p89, %p90
      %p92 = scmp.ne.s32.totalorder %s81, %s82
      %p93 = scmp.eq.s32.totalorder %s24, 0
      %p94 = por %p92, %p93
      %p95 = scmp.ne.s32.totalorder %s81, %s82
      %p96 = scmp.eq.s32.totalorder %s25, 1
      %p97 = por %p95, %p96
      %p99 = scmp.ne.s32.totalorder %s82, %s98
      %p100 = scmp.eq.s32.totalorder %s25, 0
      %p101 = por %p99, %p100
      %s102 = ssub.s32 %s26, %s45
      %s103 = ssub.s32 %s28, %s37
      %s104 = sor.u32 %s102, %s103
      %p105 = scmp.eq.s32.totalorder %s104, 0
      %s107 = sadd.s32 %s106, 1
      %s108 = scalar_select %p105, %s106, %s107
      %p111 = pneg %p105
      %p112 = scmp.eq.s32.totalorder %s19, 1
      %p113 = por %p111, %p112
      %p114 = scmp.ne.s32.totalorder %s106, %s109
      %p115 = scmp.eq.s32.totalorder %s19, 0
      %p116 = por %p114, %p115
      %p117 = scmp.ne.s32.totalorder %s106, %s109
      %p118 = scmp.eq.s32.totalorder %s24, 1
      %p119 = por %p117, %p118
      %p120 = scmp.ne.s32.totalorder %s109, %s110
      %p121 = scmp.eq.s32.totalorder %s24, 0
      %p122 = por %p120, %p121
      %p123 = scmp.ne.s32.totalorder %s109, %s110
      %p124 = scmp.eq.s32.totalorder %s25, 1
      %p125 = por %p123, %p124
      %p127 = scmp.ne.s32.totalorder %s110, %s126
      %p128 = scmp.eq.s32.totalorder %s25, 0
      %p129 = por %p127, %p128
      %s131 = sadd.s32 %s130, 1
      %p134 = scmp.eq.s32.totalorder %s19, 1
      %p135 = scmp.ne.s32.totalorder %s130, %s132
      %p136 = scmp.eq.s32.totalorder %s19, 0
      %p137 = por %p135, %p136
      %p138 = scmp.ne.s32.totalorder %s130, %s132
      %p139 = scmp.eq.s32.totalorder %s24, 1
      %p140 = por %p138, %p139
      %p141 = scmp.ne.s32.totalorder %s132, %s133
      %p142 = scmp.eq.s32.totalorder %s24, 0
      %p143 = por %p141, %p142
      %p144 = scmp.ne.s32.totalorder %s132, %s133
      %p145 = scmp.eq.s32.totalorder %s25, 1
      %p146 = por %p144, %p145
      %p148 = scmp.ne.s32.totalorder %s133, %s147
      %p149 = scmp.eq.s32.totalorder %s25, 0
      %p150 = por %p148, %p149
      %s151 = ssub.s32 %s26, %s45
      %s152 = ssub.s32 %s27, %s41
      %s153 = sor.u32 %s151, %s152
      %p154 = scmp.eq.s32.totalorder %s153, 0
      %s156 = sadd.s32 %s155, 1
      %s157 = scalar_select %p154, %s155, %s156
      %p160 = pneg %p154
      %p161 = scmp.eq.s32.totalorder %s19, 1
      %p162 = por %p160, %p161
      %p163 = scmp.ne.s32.totalorder %s155, %s158
      %p164 = scmp.eq.s32.totalorder %s19, 0
      %p165 = por %p163, %p164
      %p166 = scmp.ne.s32.totalorder %s155, %s158
      %p167 = scmp.eq.s32.totalorder %s24, 1
      %p168 = por %p166, %p167
      %p169 = scmp.ne.s32.totalorder %s158, %s159
      %p170 = scmp.eq.s32.totalorder %s24, 0
      %p171 = por %p169, %p170
      %p172 = scmp.ne.s32.totalorder %s158, %s159
      %p173 = scmp.eq.s32.totalorder %s25, 1
      %p174 = por %p172, %p173
      %p176 = scmp.ne.s32.totalorder %s159, %s175
      %p177 = scmp.eq.s32.totalorder %s25, 0
      %p178 = por %p176, %p177
      %p179 = scmp.le.s32.totalorder 1, %s19
      %p180 = scmp.lt.s32.totalorder %s19, 3
      %p181 = pnand %p179, %p180
      %p182 = pneg %p181
      // Predicated region
      $region9: #{tpu_custom_call.1} parent=5 // pred_check
        _
      $region10: #{tpu_custom_call.1} parent=5 // pred_check_branch
        %184 = sbr.rel (%p181) target = $region12
      $region11: #{tpu_custom_call.1} parent=5 // pred_region
        %s185 = ssub.s32 %s19, 1
        // Predicated region
        $region13: #{tpu_custom_call.1} parent=11 // pred_check
          %p186 = pneg %p143
        $region14: #{tpu_custom_call.1} parent=11 // pred_check_branch
          %188 = sbr.rel (%p186) target = $region16
        $region15: #{tpu_custom_call.1} parent=11 // pred_region
          _
        $region16: #{tpu_custom_call.1} parent=11 // pred_fallthru
          _
      $region12: #{tpu_custom_call.1} parent=5 // pred_fallthru
        _
      %p189 = scmp.lt.s32.totalorder %s19, 2
      // Predicated region
      $region17: #{tpu_custom_call.1} parent=5 // pred_check
        %p190 = pneg %p189
      $region18: #{tpu_custom_call.1} parent=5 // pred_check_branch
        %192 = sbr.rel (%p190) target = $region20
      $region19: #{tpu_custom_call.1} parent=5 // pred_region
        // Predicated region
        $region21: #{tpu_custom_call.1} parent=19 // pred_check
          %p193 = pneg %p60
        $region22: #{tpu_custom_call.1} parent=19 // pred_check_branch
          %195 = sbr.rel (%p193) target = $region24
        $region23: #{tpu_custom_call.1} parent=19 // pred_region
          %s196 = sand.u32 %s50, 1
          %s197 = scalar_lea.sflag [#allocation3], %s196
          %s198 = sand.u32 %s50, 1
          %s199 = smul.addr %s198, 4
          %s200 = scalar_lea.vmem [#allocation2], %s199
          %s202 = ssub.s32 64, 64
          %203 = vsyncadd %s197, %s202
          %s204 = sadd.s32 %s28, %s26
          %s205 = smul.addr %s204, 64
          %s206 = scalar_lea.hbm %s0, %s205
          %s208 = sshll.u32 %s200, 4
          %s209 = int_to_ptr.vmem [resolvable:$true] %s208
          %211 = dma.hbm_to_vmem [thread:$0]  %s206, 64, %s209, %s197
        $region24: #{tpu_custom_call.1} parent=19 // pred_fallthru
          _
        // Predicated region
        $region25: #{tpu_custom_call.1} parent=19 // pred_check
          %p212 = pneg %p88
        $region26: #{tpu_custom_call.1} parent=19 // pred_check_branch
          %214 = sbr.rel (%p212) target = $region28
        $region27: #{tpu_custom_call.1} parent=19 // pred_region
          %s215 = sand.u32 %s19, 1
          %s216 = scalar_lea.sflag [#allocation6], %s215
          %s217 = sand.u32 %s78, 1
          %s218 = smul.addr %s217, 4
          %s219 = scalar_lea.vmem [#allocation5], %s218
          %s221 = ssub.s32 64, 64
          %222 = vsyncadd %s216, %s221
          %s223 = sadd.s32 %s27, %s26
          %s224 = smul.addr %s223, 64
          %s225 = scalar_lea.hbm %s1, %s224
          %s227 = sshll.u32 %s219, 4
          %s228 = int_to_ptr.vmem [resolvable:$true] %s227
          %230 = dma.hbm_to_vmem [thread:$0]  %s225, 64, %s228, %s216
        $region28: #{tpu_custom_call.1} parent=19 // pred_fallthru
          _
        // Predicated region
        $region29: #{tpu_custom_call.1} parent=19 // pred_check
          %p231 = pneg %p116
        $region30: #{tpu_custom_call.1} parent=19 // pred_check_branch
          %233 = sbr.rel (%p231) target = $region32
        $region31: #{tpu_custom_call.1} parent=19 // pred_region
          %s234 = sand.u32 %s19, 1
          %s235 = scalar_lea.sflag [#allocation6], %s234
          %s236 = sand.u32 %s106, 1
          %s237 = smul.addr %s236, 8
          %s238 = scalar_lea.vmem [#allocation7], %s237
          %s240 = ssub.s32 128, 128
          %241 = vsyncadd %s235, %s240
          %s242 = smul.addr %s26, 2
          %s243 = sadd.s32 %s28, %s242
          %s244 = smul.addr %s243, 64
          %s245 = scalar_lea.hbm %s2, %s244
          %s246 = sshll.u32 %s238, 4
          %s247 = int_to_ptr.vmem [resolvable:$true] %s246
          %252 = dma.hbm_to_vmem [thread:$0]  %s245, 128, %s247, %s235, 64, 64, 4
        $region32: #{tpu_custom_call.1} parent=19 // pred_fallthru
          _
      $region20: #{tpu_custom_call.1} parent=5 // pred_fallthru
        _
      %p253 = scmp.le.s32.totalorder 1, %s19
      %p254 = scmp.lt.s32.totalorder %s19, 3
      %p255 = pnand %p253, %p254
      %p256 = pneg %p255
      // Predicated region
      $region33: #{tpu_custom_call.1} parent=5 // pred_check
        _
      $region34: #{tpu_custom_call.1} parent=5 // pred_check_branch
        %258 = sbr.rel (%p255) target = $region36
      $region35: #{tpu_custom_call.1} parent=5 // pred_region
        %s259 = ssub.s32 %s19, 1
        %s260 = sand.u32 %s53, 1
        %s261 = scalar_lea.sflag [#allocation3], %s260
        %s262 = sand.u32 %s53, 1
        %s263 = smul.addr %s262, 4
        %s264 = scalar_lea.vmem [#allocation2], %s263
        // Predicated region
        $region37: #{tpu_custom_call.1} parent=35 // pred_check
          %p265 = pneg %p66
        $region38: #{tpu_custom_call.1} parent=35 // pred_check_branch
          %267 = sbr.rel (%p265) target = $region40
        $region39: #{tpu_custom_call.1} parent=35 // pred_region
          %268 = dma.done %s261, 64
        $region40: #{tpu_custom_call.1} parent=35 // pred_fallthru
          _
        %s269 = sand.u32 %s24, 1
        %s270 = scalar_lea.sflag [#allocation6], %s269
        %s271 = sand.u32 %s81, 1
        %s272 = smul.addr %s271, 4
        %s273 = scalar_lea.vmem [#allocation5], %s272
        // Predicated region
        $region41: #{tpu_custom_call.1} parent=35 // pred_check
          %p274 = pneg %p94
        $region42: #{tpu_custom_call.1} parent=35 // pred_check_branch
          %276 = sbr.rel (%p274) target = $region44
        $region43: #{tpu_custom_call.1} parent=35 // pred_region
          %277 = dma.done %s270, 64
        $region44: #{tpu_custom_call.1} parent=35 // pred_fallthru
          _
        %s278 = sand.u32 %s24, 1
        %s279 = scalar_lea.sflag [#allocation6], %s278
        %s280 = sand.u32 %s109, 1
        %s281 = smul.addr %s280, 8
        %s282 = scalar_lea.vmem [#allocation7], %s281
        // Predicated region
        $region45: #{tpu_custom_call.1} parent=35 // pred_check
          %p283 = pneg %p122
        $region46: #{tpu_custom_call.1} parent=35 // pred_check_branch
          %285 = sbr.rel (%p283) target = $region48
        $region47: #{tpu_custom_call.1} parent=35 // pred_region
          %286 = dma.done %s279, 128
        $region48: #{tpu_custom_call.1} parent=35 // pred_fallthru
          _
        %s287 = sand.u32 %s53, 1
        %s288 = scalar_lea.sflag [#allocation3], %s287
        %s289 = sand.u32 %s53, 1
        %s290 = smul.addr %s289, 4
        %s291 = scalar_lea.vmem [#allocation2], %s290
        %p292 = pneg %p66
        %p293 = pneg %p63
        %s294 = sand.u32 %s24, 1
        %s295 = scalar_lea.sflag [#allocation6], %s294
        %s296 = sand.u32 %s81, 1
        %s297 = smul.addr %s296, 4
        %s298 = scalar_lea.vmem [#allocation5], %s297
        %p299 = pneg %p94
        %p300 = pneg %p91
        %s301 = sand.u32 %s24, 1
        %s302 = scalar_lea.sflag [#allocation6], %s301
        %s303 = sand.u32 %s109, 1
        %s304 = smul.addr %s303, 8
        %s305 = scalar_lea.vmem [#allocation7], %s304
        %p306 = pneg %p122
        %p307 = pneg %p119
        %p308 = pneg %p143
        %p309 = pneg %p140
        %p310 = pneg %p171
        %p311 = pneg %p168
        %s312 = sand.u32 %s158, 1
        %s313 = scalar_lea.sflag [#allocation4], %s312
        %s314 = sand.u32 %s158, 1
        %s315 = smul.addr %s314, 8
        %s316 = scalar_lea.vmem [#allocation8], %s315
        %p317 = scmp.eq.s32.totalorder %s31, 0
        // Predicated region
        $region49: #{tpu_custom_call.1} parent=35 // pred_check
          %p318 = pneg %p317
        $region50: #{tpu_custom_call.1} parent=35 // pred_check_branch
          %320 = sbr.rel (%p318) target = $region52
        $region51: #{tpu_custom_call.1} parent=35 // pred_region
          %321 = vst [vmem:[%s316] sm:$0xf] 0.0
          %322 = vst [vmem:[%s316 + $0x4] sm:$0xf] 0.0
        $region52: #{tpu_custom_call.1} parent=35 // pred_fallthru
          _
        %v323 = vld [vmem:[%s264] sm:$0xf]
        %v324 = vld [vmem:[%s273] sm:$0xf]
        %v325 = vlaneseq
        %v326 = vshrl.u32 %v325, 7
        %v327 = vsub.s32 0, %v326
        %v328 = vrot.slane %v324, %v327
        %330 = vbcast.lane.b32.xlu0 %v328, 256
        %v331 = vpop.permute.xlu0 %330
        %s333 = sor.u32 256, 8
        %334 = vbcast.lane.b32.xlu0 %v328, %s333
        %v335 = vpop.permute.xlu0 %334
        %s337 = sor.u32 256, 16
        %338 = vbcast.lane.b32.xlu0 %v328, %s337
        %v339 = vpop.permute.xlu0 %338
        %s341 = sor.u32 256, 24
        %342 = vbcast.lane.b32.xlu0 %v328, %s341
        %v343 = vpop.permute.xlu0 %342
        %s345 = sor.u32 256, 32
        %346 = vbcast.lane.b32.xlu0 %v328, %s345
        %v347 = vpop.permute.xlu0 %346
        %s349 = sor.u32 256, 40
        %350 = vbcast.lane.b32.xlu0 %v328, %s349
        %v351 = vpop.permute.xlu0 %350
        %s353 = sor.u32 256, 48
        %354 = vbcast.lane.b32.xlu0 %v328, %s353
        %v355 = vpop.permute.xlu0 %354
        %s357 = sor.u32 256, 56
        %358 = vbcast.lane.b32.xlu0 %v328, %s357
        %v359 = vpop.permute.xlu0 %358
        %s361 = sor.u32 256, 64
        %362 = vbcast.lane.b32.xlu0 %v328, %s361
        %v363 = vpop.permute.xlu0 %362
        %s365 = sor.u32 256, 72
        %366 = vbcast.lane.b32.xlu0 %v328, %s365
        %v367 = vpop.permute.xlu0 %366
        %s369 = sor.u32 256, 80
        %370 = vbcast.lane.b32.xlu0 %v328, %s369
        %v371 = vpop.permute.xlu0 %370
        %s373 = sor.u32 256, 88
        %374 = vbcast.lane.b32.xlu0 %v328, %s373
        %v375 = vpop.permute.xlu0 %374
        %s377 = sor.u32 256, 96
        %378 = vbcast.lane.b32.xlu0 %v328, %s377
        %v379 = vpop.permute.xlu0 %378
        %s381 = sor.u32 256, 104
        %382 = vbcast.lane.b32.xlu0 %v328, %s381
        %v383 = vpop.permute.xlu0 %382
        %s385 = sor.u32 256, 112
        %386 = vbcast.lane.b32.xlu0 %v328, %s385
        %v387 = vpop.permute.xlu0 %386
        %s389 = sor.u32 256, 120
        %390 = vbcast.lane.b32.xlu0 %v328, %s389
        %v391 = vpop.permute.xlu0 %390
        %v392 = vlaneseq
        %v393 = vshrl.u32 %v392, 7
        %v394 = vsub.s32 1, %v393
        %v395 = vrot.slane %v324, %v394
        %397 = vbcast.lane.b32.xlu0 %v395, 256
        %v398 = vpop.permute.xlu0 %397
        %s400 = sor.u32 256, 8
        %401 = vbcast.lane.b32.xlu0 %v395, %s400
        %v402 = vpop.permute.xlu0 %401
        %s404 = sor.u32 256, 16
        %405 = vbcast.lane.b32.xlu0 %v395, %s404
        %v406 = vpop.permute.xlu0 %405
        %s408 = sor.u32 256, 24
        %409 = vbcast.lane.b32.xlu0 %v395, %s408
        %v410 = vpop.permute.xlu0 %409
        %s412 = sor.u32 256, 32
        %413 = vbcast.lane.b32.xlu0 %v395, %s412
        %v414 = vpop.permute.xlu0 %413
        %s416 = sor.u32 256, 40
        %417 = vbcast.lane.b32.xlu0 %v395, %s416
        %v418 = vpop.permute.xlu0 %417
        %s420 = sor.u32 256, 48
        %421 = vbcast.lane.b32.xlu0 %v395, %s420
        %v422 = vpop.permute.xlu0 %421
        %s424 = sor.u32 256, 56
        %425 = vbcast.lane.b32.xlu0 %v395, %s424
        %v426 = vpop.permute.xlu0 %425
        %s428 = sor.u32 256, 64
        %429 = vbcast.lane.b32.xlu0 %v395, %s428
        %v430 = vpop.permute.xlu0 %429
        %s432 = sor.u32 256, 72
        %433 = vbcast.lane.b32.xlu0 %v395, %s432
        %v434 = vpop.permute.xlu0 %433
        %s436 = sor.u32 256, 80
        %437 = vbcast.lane.b32.xlu0 %v395, %s436
        %v438 = vpop.permute.xlu0 %437
        %s440 = sor.u32 256, 88
        %441 = vbcast.lane.b32.xlu0 %v395, %s440
        %v442 = vpop.permute.xlu0 %441
        %s444 = sor.u32 256, 96
        %445 = vbcast.lane.b32.xlu0 %v395, %s444
        %v446 = vpop.permute.xlu0 %445
        %s448 = sor.u32 256, 104
        %449 = vbcast.lane.b32.xlu0 %v395, %s448
        %v450 = vpop.permute.xlu0 %449
        %s452 = sor.u32 256, 112
        %453 = vbcast.lane.b32.xlu0 %v395, %s452
        %v454 = vpop.permute.xlu0 %453
        %s456 = sor.u32 256, 120
        %457 = vbcast.lane.b32.xlu0 %v395, %s456
        %v458 = vpop.permute.xlu0 %457
        %v459 = vlaneseq
        %v460 = vshrl.u32 %v459, 7
        %v461 = vsub.s32 2, %v460
        %v462 = vrot.slane %v324, %v461
        %464 = vbcast.lane.b32.xlu0 %v462, 256
        %v465 = vpop.permute.xlu0 %464
        %s467 = sor.u32 256, 8
        %468 = vbcast.lane.b32.xlu0 %v462, %s467
        %v469 = vpop.permute.xlu0 %468
        %s471 = sor.u32 256, 16
        %472 = vbcast.lane.b32.xlu0 %v462, %s471
        %v473 = vpop.permute.xlu0 %472
        %s475 = sor.u32 256, 24
        %476 = vbcast.lane.b32.xlu0 %v462, %s475
        %v477 = vpop.permute.xlu0 %476
        %s479 = sor.u32 256, 32
        %480 = vbcast.lane.b32.xlu0 %v462, %s479
        %v481 = vpop.permute.xlu0 %480
        %s483 = sor.u32 256, 40
        %484 = vbcast.lane.b32.xlu0 %v462, %s483
        %v485 = vpop.permute.xlu0 %484
        %s487 = sor.u32 256, 48
        %488 = vbcast.lane.b32.xlu0 %v462, %s487
        %v489 = vpop.permute.xlu0 %488
        %s491 = sor.u32 256, 56
        %492 = vbcast.lane.b32.xlu0 %v462, %s491
        %v493 = vpop.permute.xlu0 %492
        %s495 = sor.u32 256, 64
        %496 = vbcast.lane.b32.xlu0 %v462, %s495
        %v497 = vpop.permute.xlu0 %496
        %s499 = sor.u32 256, 72
        %500 = vbcast.lane.b32.xlu0 %v462, %s499
        %v501 = vpop.permute.xlu0 %500
        %s503 = sor.u32 256, 80
        %504 = vbcast.lane.b32.xlu0 %v462, %s503
        %v505 = vpop.permute.xlu0 %504
        %s507 = sor.u32 256, 88
        %508 = vbcast.lane.b32.xlu0 %v462, %s507
        %v509 = vpop.permute.xlu0 %508
        %s511 = sor.u32 256, 96
        %512 = vbcast.lane.b32.xlu0 %v462, %s511
        %v513 = vpop.permute.xlu0 %512
        %s515 = sor.u32 256, 104
        %516 = vbcast.lane.b32.xlu0 %v462, %s515
        %v517 = vpop.permute.xlu0 %516
        %s519 = sor.u32 256, 112
        %520 = vbcast.lane.b32.xlu0 %v462, %s519
        %v521 = vpop.permute.xlu0 %520
        %s523 = sor.u32 256, 120
        %524 = vbcast.lane.b32.xlu0 %v462, %s523
        %v525 = vpop.permute.xlu0 %524
        %v526 = vlaneseq
        %v527 = vshrl.u32 %v526, 7
        %v528 = vsub.s32 3, %v527
        %v529 = vrot.slane %v324, %v528
        %531 = vbcast.lane.b32.xlu0 %v529, 256
        %v532 = vpop.permute.xlu0 %531
        %s534 = sor.u32 256, 8
        %535 = vbcast.lane.b32.xlu0 %v529, %s534
        %v536 = vpop.permute.xlu0 %535
        %s538 = sor.u32 256, 16
        %539 = vbcast.lane.b32.xlu0 %v529, %s538
        %v540 = vpop.permute.xlu0 %539
        %s542 = sor.u32 256, 24
        %543 = vbcast.lane.b32.xlu0 %v529, %s542
        %v544 = vpop.permute.xlu0 %543
        %s546 = sor.u32 256, 32
        %547 = vbcast.lane.b32.xlu0 %v529, %s546
        %v548 = vpop.permute.xlu0 %547
        %s550 = sor.u32 256, 40
        %551 = vbcast.lane.b32.xlu0 %v529, %s550
        %v552 = vpop.permute.xlu0 %551
        %s554 = sor.u32 256, 48
        %555 = vbcast.lane.b32.xlu0 %v529, %s554
        %v556 = vpop.permute.xlu0 %555
        %s558 = sor.u32 256, 56
        %559 = vbcast.lane.b32.xlu0 %v529, %s558
        %v560 = vpop.permute.xlu0 %559
        %s562 = sor.u32 256, 64
        %563 = vbcast.lane.b32.xlu0 %v529, %s562
        %v564 = vpop.permute.xlu0 %563
        %s566 = sor.u32 256, 72
        %567 = vbcast.lane.b32.xlu0 %v529, %s566
        %v568 = vpop.permute.xlu0 %567
        %s570 = sor.u32 256, 80
        %571 = vbcast.lane.b32.xlu0 %v529, %s570
        %v572 = vpop.permute.xlu0 %571
        %s574 = sor.u32 256, 88
        %575 = vbcast.lane.b32.xlu0 %v529, %s574
        %v576 = vpop.permute.xlu0 %575
        %s578 = sor.u32 256, 96
        %579 = vbcast.lane.b32.xlu0 %v529, %s578
        %v580 = vpop.permute.xlu0 %579
        %s582 = sor.u32 256, 104
        %583 = vbcast.lane.b32.xlu0 %v529, %s582
        %v584 = vpop.permute.xlu0 %583
        %s586 = sor.u32 256, 112
        %587 = vbcast.lane.b32.xlu0 %v529, %s586
        %v588 = vpop.permute.xlu0 %587
        %s590 = sor.u32 256, 120
        %591 = vbcast.lane.b32.xlu0 %v529, %s590
        %v592 = vpop.permute.xlu0 %591
        %v595 = vunpack.c.l.s4 1966171168
        %v596 = vunpack.c.0.s8 %v595
        %v597 = vlaneseq
        %v598 = vshrl.u32 %v597, 7
        %v599 = vsub.s32 %v596, %v598
        %v600 = vrot.slane %v323, %v599
        %v601 = vcombine.high %v600, %v600
        %v603 = vunpack.c.l.s4 1966171168
        %v604 = vunpack.c.0.s8 %v603
        %v605 = vlaneseq
        %v606 = vshrl.u32 %v605, 7
        %v607 = vsub.s32 %v604, %v606
        %v608 = vrot.slane %v600, %v607
        %v610 = vunpack.c.l.s4 1966171168
        %v611 = vunpack.c.0.s8 %v610
        %v612 = vlaneseq
        %v613 = vshrl.u32 %v612, 7
        %v614 = vsub.s32 %v611, %v613
        %v615 = vrot.slane %v601, %v614
        %v616 = vcombine.high %v608, %v608
        %v617 = vcombine.high %v615, %v615
        %v618 = vlaneseq
        %v619 = vshrl.u32 %v618, 7
        %v620 = vsub.s32 0, %v619
        %v621 = vrot.slane %v608, %v620
        %v622 = vlaneseq
        %v623 = vshrl.u32 %v622, 7
        %v624 = vsub.s32 0, %v623
        %v625 = vrot.slane %v615, %v624
        %v626 = vlaneseq
        %v627 = vshrl.u32 %v626, 7
        %v628 = vsub.s32 0, %v627
        %v629 = vrot.slane %v616, %v628
        %v630 = vlaneseq
        %v631 = vshrl.u32 %v630, 7
        %v632 = vsub.s32 0, %v631
        %v633 = vrot.slane %v617, %v632
        %v638 = vsub.f32 %v331, %v621
        %v639 = vsub.f32 %v335, %v621
        %v640 = vsub.f32 %v339, %v621
        %v641 = vsub.f32 %v343, %v621
        %v642 = vsub.f32 %v347, %v621
        %v643 = vsub.f32 %v351, %v621
        %v644 = vsub.f32 %v355, %v621
        %v645 = vsub.f32 %v359, %v621
        %v646 = vsub.f32 %v363, %v621
        %v647 = vsub.f32 %v367, %v621
        %v648 = vsub.f32 %v371, %v621
        %v649 = vsub.f32 %v375, %v621
        %v650 = vsub.f32 %v379, %v621
        %v651 = vsub.f32 %v383, %v621
        %v652 = vsub.f32 %v387, %v621
        %v653 = vsub.f32 %v391, %v621
        %v654 = vsub.f32 %v398, %v625
        %v655 = vsub.f32 %v402, %v625
        %v656 = vsub.f32 %v406, %v625
        %v657 = vsub.f32 %v410, %v625
        %v658 = vsub.f32 %v414, %v625
        %v659 = vsub.f32 %v418, %v625
        %v660 = vsub.f32 %v422, %v625
        %v661 = vsub.f32 %v426, %v625
        %v662 = vsub.f32 %v430, %v625
        %v663 = vsub.f32 %v434, %v625
        %v664 = vsub.f32 %v438, %v625
        %v665 = vsub.f32 %v442, %v625
        %v666 = vsub.f32 %v446, %v625
        %v667 = vsub.f32 %v450, %v625
        %v668 = vsub.f32 %v454, %v625
        %v669 = vsub.f32 %v458, %v625
        %v670 = vsub.f32 %v465, %v629
        %v671 = vsub.f32 %v469, %v629
        %v672 = vsub.f32 %v473, %v629
        %v673 = vsub.f32 %v477, %v629
        %v674 = vsub.f32 %v481, %v629
        %v675 = vsub.f32 %v485, %v629
        %v676 = vsub.f32 %v489, %v629
        %v677 = vsub.f32 %v493, %v629
        %v678 = vsub.f32 %v497, %v629
        %v679 = vsub.f32 %v501, %v629
        %v680 = vsub.f32 %v505, %v629
        %v681 = vsub.f32 %v509, %v629
        %v682 = vsub.f32 %v513, %v629
        %v683 = vsub.f32 %v517, %v629
        %v684 = vsub.f32 %v521, %v629
        %v685 = vsub.f32 %v525, %v629
        %v686 = vsub.f32 %v532, %v633
        %v687 = vsub.f32 %v536, %v633
        %v688 = vsub.f32 %v540, %v633
        %v689 = vsub.f32 %v544, %v633
        %v690 = vsub.f32 %v548, %v633
        %v691 = vsub.f32 %v552, %v633
        %v692 = vsub.f32 %v556, %v633
        %v693 = vsub.f32 %v560, %v633
        %v694 = vsub.f32 %v564, %v633
        %v695 = vsub.f32 %v568, %v633
        %v696 = vsub.f32 %v572, %v633
        %v697 = vsub.f32 %v576, %v633
        %v698 = vsub.f32 %v580, %v633
        %v699 = vsub.f32 %v584, %v633
        %v700 = vsub.f32 %v588, %v633
        %v701 = vsub.f32 %v592, %v633
        %v702 = vmul.f32 %v638, %v638
        %v703 = vmul.f32 %v639, %v639
        %v704 = vmul.f32 %v640, %v640
        %v705 = vmul.f32 %v641, %v641
        %v706 = vmul.f32 %v642, %v642
        %v707 = vmul.f32 %v643, %v643
        %v708 = vmul.f32 %v644, %v644
        %v709 = vmul.f32 %v645, %v645
        %v710 = vmul.f32 %v646, %v646
        %v711 = vmul.f32 %v647, %v647
        %v712 = vmul.f32 %v648, %v648
        %v713 = vmul.f32 %v649, %v649
        %v714 = vmul.f32 %v650, %v650
        %v715 = vmul.f32 %v651, %v651
        %v716 = vmul.f32 %v652, %v652
        %v717 = vmul.f32 %v653, %v653
        %v718 = vmul.f32 %v654, %v654
        %v719 = vmul.f32 %v655, %v655
        %v720 = vmul.f32 %v656, %v656
        %v721 = vmul.f32 %v657, %v657
        %v722 = vmul.f32 %v658, %v658
        %v723 = vmul.f32 %v659, %v659
        %v724 = vmul.f32 %v660, %v660
        %v725 = vmul.f32 %v661, %v661
        %v726 = vmul.f32 %v662, %v662
        %v727 = vmul.f32 %v663, %v663
        %v728 = vmul.f32 %v664, %v664
        %v729 = vmul.f32 %v665, %v665
        %v730 = vmul.f32 %v666, %v666
        %v731 = vmul.f32 %v667, %v667
        %v732 = vmul.f32 %v668, %v668
        %v733 = vmul.f32 %v669, %v669
        %v734 = vmul.f32 %v670, %v670
        %v735 = vmul.f32 %v671, %v671
        %v736 = vmul.f32 %v672, %v672
        %v737 = vmul.f32 %v673, %v673
        %v738 = vmul.f32 %v674, %v674
        %v739 = vmul.f32 %v675, %v675
        %v740 = vmul.f32 %v676, %v676
        %v741 = vmul.f32 %v677, %v677
        %v742 = vmul.f32 %v678, %v678
        %v743 = vmul.f32 %v679, %v679
        %v744 = vmul.f32 %v680, %v680
        %v745 = vmul.f32 %v681, %v681
        %v746 = vmul.f32 %v682, %v682
        %v747 = vmul.f32 %v683, %v683
        %v748 = vmul.f32 %v684, %v684
        %v749 = vmul.f32 %v685, %v685
        %v750 = vmul.f32 %v686, %v686
        %v751 = vmul.f32 %v687, %v687
        %v752 = vmul.f32 %v688, %v688
        %v753 = vmul.f32 %v689, %v689
        %v754 = vmul.f32 %v690, %v690
        %v755 = vmul.f32 %v691, %v691
        %v756 = vmul.f32 %v692, %v692
        %v757 = vmul.f32 %v693, %v693
        %v758 = vmul.f32 %v694, %v694
        %v759 = vmul.f32 %v695, %v695
        %v760 = vmul.f32 %v696, %v696
        %v761 = vmul.f32 %v697, %v697
        %v762 = vmul.f32 %v698, %v698
        %v763 = vmul.f32 %v699, %v699
        %v764 = vmul.f32 %v700, %v700
        %v765 = vmul.f32 %v701, %v701
        %v766 = vld [vmem:[%s3] sm:$0x1]
        %v767 = vlaneseq
        %v768 = vshrl.u32 %v767, 7
        %v769 = vsub.s32 0, %v768
        %v770 = vrot.slane %v766, %v769
        %772 = vbcast.lane.b32.xlu0 %v770, 256
        %v773 = vpop.permute.xlu0 %772
        %v774 = vlaneseq
        %v775 = vshrl.u32 %v774, 7
        %v776 = vsub.s32 0, %v775
        %v777 = vrot.slane %v773, %v776
        %v778 = vlaneseq
        %v779 = vshrl.u32 %v778, 7
        %v780 = vsub.s32 1, %v779
        %v781 = vrot.slane %v773, %v780
        %v782 = vlaneseq
        %v783 = vshrl.u32 %v782, 7
        %v784 = vsub.s32 2, %v783
        %v785 = vrot.slane %v773, %v784
        %v786 = vlaneseq
        %v787 = vshrl.u32 %v786, 7
        %v788 = vsub.s32 3, %v787
        %v789 = vrot.slane %v773, %v788
        %v790 = vmul.f32 %v777, %v702
        %v791 = vmul.f32 %v777, %v703
        %v792 = vmul.f32 %v777, %v704
        %v793 = vmul.f32 %v777, %v705
        %v794 = vmul.f32 %v777, %v706
        %v795 = vmul.f32 %v777, %v707
        %v796 = vmul.f32 %v777, %v708
        %v797 = vmul.f32 %v777, %v709
        %v798 = vmul.f32 %v777, %v710
        %v799 = vmul.f32 %v777, %v711
        %v800 = vmul.f32 %v777, %v712
        %v801 = vmul.f32 %v777, %v713
        %v802 = vmul.f32 %v777, %v714
        %v803 = vmul.f32 %v777, %v715
        %v804 = vmul.f32 %v777, %v716
        %v805 = vmul.f32 %v777, %v717
        %v806 = vmul.f32 %v781, %v718
        %v807 = vmul.f32 %v781, %v719
        %v808 = vmul.f32 %v781, %v720
        %v809 = vmul.f32 %v781, %v721
        %v810 = vmul.f32 %v781, %v722
        %v811 = vmul.f32 %v781, %v723
        %v812 = vmul.f32 %v781, %v724
        %v813 = vmul.f32 %v781, %v725
        %v814 = vmul.f32 %v781, %v726
        %v815 = vmul.f32 %v781, %v727
        %v816 = vmul.f32 %v781, %v728
        %v817 = vmul.f32 %v781, %v729
        %v818 = vmul.f32 %v781, %v730
        %v819 = vmul.f32 %v781, %v731
        %v820 = vmul.f32 %v781, %v732
        %v821 = vmul.f32 %v781, %v733
        %v822 = vmul.f32 %v785, %v734
        %v823 = vmul.f32 %v785, %v735
        %v824 = vmul.f32 %v785, %v736
        %v825 = vmul.f32 %v785, %v737
        %v826 = vmul.f32 %v785, %v738
        %v827 = vmul.f32 %v785, %v739
        %v828 = vmul.f32 %v785, %v740
        %v829 = vmul.f32 %v785, %v741
        %v830 = vmul.f32 %v785, %v742
        %v831 = vmul.f32 %v785, %v743
        %v832 = vmul.f32 %v785, %v744
        %v833 = vmul.f32 %v785, %v745
        %v834 = vmul.f32 %v785, %v746
        %v835 = vmul.f32 %v785, %v747
        %v836 = vmul.f32 %v785, %v748
        %v837 = vmul.f32 %v785, %v749
        %v838 = vmul.f32 %v789, %v750
        %v839 = vmul.f32 %v789, %v751
        %v840 = vmul.f32 %v789, %v752
        %v841 = vmul.f32 %v789, %v753
        %v842 = vmul.f32 %v789, %v754
        %v843 = vmul.f32 %v789, %v755
        %v844 = vmul.f32 %v789, %v756
        %v845 = vmul.f32 %v789, %v757
        %v846 = vmul.f32 %v789, %v758
        %v847 = vmul.f32 %v789, %v759
        %v848 = vmul.f32 %v789, %v760
        %v849 = vmul.f32 %v789, %v761
        %v850 = vmul.f32 %v789, %v762
        %v851 = vmul.f32 %v789, %v763
        %v852 = vmul.f32 %v789, %v764
        %v853 = vmul.f32 %v789, %v765
        %v854 = vmul.f32 %v790, 1.442695
        %v855 = vpow.pop %v854
        %v856 = vmul.f32 %v791, 1.442695
        %v857 = vpow.pop %v856
        %v858 = vmul.f32 %v792, 1.442695
        %v859 = vpow.pop %v858
        %v860 = vmul.f32 %v793, 1.442695
        %v861 = vpow.pop %v860
        %v862 = vmul.f32 %v794, 1.442695
        %v863 = vpow.pop %v862
        %v864 = vmul.f32 %v795, 1.442695
        %v865 = vpow.pop %v864
        %v866 = vmul.f32 %v796, 1.442695
        %v867 = vpow.pop %v866
        %v868 = vmul.f32 %v797, 1.442695
        %v869 = vpow.pop %v868
        %v870 = vmul.f32 %v798, 1.442695
        %v871 = vpow.pop %v870
        %v872 = vmul.f32 %v799, 1.442695
        %v873 = vpow.pop %v872
        %v874 = vmul.f32 %v800, 1.442695
        %v875 = vpow.pop %v874
        %v876 = vmul.f32 %v801, 1.442695
        %v877 = vpow.pop %v876
        %v878 = vmul.f32 %v802, 1.442695
        %v879 = vpow.pop %v878
        %v880 = vmul.f32 %v803, 1.442695
        %v881 = vpow.pop %v880
        %v882 = vmul.f32 %v804, 1.442695
        %v883 = vpow.pop %v882
        %v884 = vmul.f32 %v805, 1.442695
        %v885 = vpow.pop %v884
        %v886 = vmul.f32 %v806, 1.442695
        %v887 = vpow.pop %v886
        %v888 = vmul.f32 %v807, 1.442695
        %v889 = vpow.pop %v888
        %v890 = vmul.f32 %v808, 1.442695
        %v891 = vpow.pop %v890
        %v892 = vmul.f32 %v809, 1.442695
        %v893 = vpow.pop %v892
        %v894 = vmul.f32 %v810, 1.442695
        %v895 = vpow.pop %v894
        %v896 = vmul.f32 %v811, 1.442695
        %v897 = vpow.pop %v896
        %v898 = vmul.f32 %v812, 1.442695
        %v899 = vpow.pop %v898
        %v900 = vmul.f32 %v813, 1.442695
        %v901 = vpow.pop %v900
        %v902 = vmul.f32 %v814, 1.442695
        %v903 = vpow.pop %v902
        %v904 = vmul.f32 %v815, 1.442695
        %v905 = vpow.pop %v904
        %v906 = vmul.f32 %v816, 1.442695
        %v907 = vpow.pop %v906
        %v908 = vmul.f32 %v817, 1.442695
        %v909 = vpow.pop %v908
        %v910 = vmul.f32 %v818, 1.442695
        %v911 = vpow.pop %v910
        %v912 = vmul.f32 %v819, 1.442695
        %v913 = vpow.pop %v912
        %v914 = vmul.f32 %v820, 1.442695
        %v915 = vpow.pop %v914
        %v916 = vmul.f32 %v821, 1.442695
        %v917 = vpow.pop %v916
        %v918 = vmul.f32 %v822, 1.442695
        %v919 = vpow.pop %v918
        %v920 = vmul.f32 %v823, 1.442695
        %v921 = vpow.pop %v920
        %v922 = vmul.f32 %v824, 1.442695
        %v923 = vpow.pop %v922
        %v924 = vmul.f32 %v825, 1.442695
        %v925 = vpow.pop %v924
        %v926 = vmul.f32 %v826, 1.442695
        %v927 = vpow.pop %v926
        %v928 = vmul.f32 %v827, 1.442695
        %v929 = vpow.pop %v928
        %v930 = vmul.f32 %v828, 1.442695
        %v931 = vpow.pop %v930
        %v932 = vmul.f32 %v829, 1.442695
        %v933 = vpow.pop %v932
        %v934 = vmul.f32 %v830, 1.442695
        %v935 = vpow.pop %v934
        %v936 = vmul.f32 %v831, 1.442695
        %v937 = vpow.pop %v936
        %v938 = vmul.f32 %v832, 1.442695
        %v939 = vpow.pop %v938
        %v940 = vmul.f32 %v833, 1.442695
        %v941 = vpow.pop %v940
        %v942 = vmul.f32 %v834, 1.442695
        %v943 = vpow.pop %v942
        %v944 = vmul.f32 %v835, 1.442695
        %v945 = vpow.pop %v944
        %v946 = vmul.f32 %v836, 1.442695
        %v947 = vpow.pop %v946
        %v948 = vmul.f32 %v837, 1.442695
        %v949 = vpow.pop %v948
        %v950 = vmul.f32 %v838, 1.442695
        %v951 = vpow.pop %v950
        %v952 = vmul.f32 %v839, 1.442695
        %v953 = vpow.pop %v952
        %v954 = vmul.f32 %v840, 1.442695
        %v955 = vpow.pop %v954
        %v956 = vmul.f32 %v841, 1.442695
        %v957 = vpow.pop %v956
        %v958 = vmul.f32 %v842, 1.442695
        %v959 = vpow.pop %v958
        %v960 = vmul.f32 %v843, 1.442695
        %v961 = vpow.pop %v960
        %v962 = vmul.f32 %v844, 1.442695
        %v963 = vpow.pop %v962
        %v964 = vmul.f32 %v845, 1.442695
        %v965 = vpow.pop %v964
        %v966 = vmul.f32 %v846, 1.442695
        %v967 = vpow.pop %v966
        %v968 = vmul.f32 %v847, 1.442695
        %v969 = vpow.pop %v968
        %v970 = vmul.f32 %v848, 1.442695
        %v971 = vpow.pop %v970
        %v972 = vmul.f32 %v849, 1.442695
        %v973 = vpow.pop %v972
        %v974 = vmul.f32 %v850, 1.442695
        %v975 = vpow.pop %v974
        %v976 = vmul.f32 %v851, 1.442695
        %v977 = vpow.pop %v976
        %v978 = vmul.f32 %v852, 1.442695
        %v979 = vpow.pop %v978
        %v980 = vmul.f32 %v853, 1.442695
        %v981 = vpow.pop %v980
        %v982 = vld [vmem:[%s282] sm:$0xf]
        %v985 = vunpack.c.l.s4 1966171168
        %v986 = vunpack.c.0.s8 %v985
        %v987 = vlaneseq
        %v988 = vshrl.u32 %v987, 7
        %v989 = vsub.s32 %v986, %v988
        %v990 = vrot.slane %v982, %v989
        %v991 = vcombine.high %v990, %v990
        %v993 = vunpack.c.l.s4 1966171168
        %v994 = vunpack.c.0.s8 %v993
        %v995 = vlaneseq
        %v996 = vshrl.u32 %v995, 7
        %v997 = vsub.s32 %v994, %v996
        %v998 = vrot.slane %v990, %v997
        %v1000 = vunpack.c.l.s4 1966171168
        %v1001 = vunpack.c.0.s8 %v1000
        %v1002 = vlaneseq
        %v1003 = vshrl.u32 %v1002, 7
        %v1004 = vsub.s32 %v1001, %v1003
        %v1005 = vrot.slane %v991, %v1004
        %v1006 = vcombine.high %v998, %v998
        %v1007 = vcombine.high %v1005, %v1005
        %v1008 = vlaneseq
        %v1009 = vshrl.u32 %v1008, 7
        %v1010 = vsub.s32 0, %v1009
        %v1011 = vrot.slane %v998, %v1010
        %v1012 = vlaneseq
        %v1013 = vshrl.u32 %v1012, 7
        %v1014 = vsub.s32 0, %v1013
        %v1015 = vrot.slane %v1005, %v1014
        %v1016 = vlaneseq
        %v1017 = vshrl.u32 %v1016, 7
        %v1018 = vsub.s32 0, %v1017
        %v1019 = vrot.slane %v1006, %v1018
        %v1020 = vlaneseq
        %v1021 = vshrl.u32 %v1020, 7
        %v1022 = vsub.s32 0, %v1021
        %v1023 = vrot.slane %v1007, %v1022
        %v1028 = vmul.f32 %v1011, %v855
        %v1029 = vmul.f32 %v1011, %v857
        %v1030 = vmul.f32 %v1011, %v859
        %v1031 = vmul.f32 %v1011, %v861
        %v1032 = vmul.f32 %v1011, %v863
        %v1033 = vmul.f32 %v1011, %v865
        %v1034 = vmul.f32 %v1011, %v867
        %v1035 = vmul.f32 %v1011, %v869
        %v1036 = vmul.f32 %v1011, %v871
        %v1037 = vmul.f32 %v1011, %v873
        %v1038 = vmul.f32 %v1011, %v875
        %v1039 = vmul.f32 %v1011, %v877
        %v1040 = vmul.f32 %v1011, %v879
        %v1041 = vmul.f32 %v1011, %v881
        %v1042 = vmul.f32 %v1011, %v883
        %v1043 = vmul.f32 %v1011, %v885
        %v1044 = vmul.f32 %v1015, %v887
        %v1045 = vmul.f32 %v1015, %v889
        %v1046 = vmul.f32 %v1015, %v891
        %v1047 = vmul.f32 %v1015, %v893
        %v1048 = vmul.f32 %v1015, %v895
        %v1049 = vmul.f32 %v1015, %v897
        %v1050 = vmul.f32 %v1015, %v899
        %v1051 = vmul.f32 %v1015, %v901
        %v1052 = vmul.f32 %v1015, %v903
        %v1053 = vmul.f32 %v1015, %v905
        %v1054 = vmul.f32 %v1015, %v907
        %v1055 = vmul.f32 %v1015, %v909
        %v1056 = vmul.f32 %v1015, %v911
        %v1057 = vmul.f32 %v1015, %v913
        %v1058 = vmul.f32 %v1015, %v915
        %v1059 = vmul.f32 %v1015, %v917
        %v1060 = vmul.f32 %v1019, %v919
        %v1061 = vmul.f32 %v1019, %v921
        %v1062 = vmul.f32 %v1019, %v923
        %v1063 = vmul.f32 %v1019, %v925
        %v1064 = vmul.f32 %v1019, %v927
        %v1065 = vmul.f32 %v1019, %v929
        %v1066 = vmul.f32 %v1019, %v931
        %v1067 = vmul.f32 %v1019, %v933
        %v1068 = vmul.f32 %v1019, %v935
        %v1069 = vmul.f32 %v1019, %v937
        %v1070 = vmul.f32 %v1019, %v939
        %v1071 = vmul.f32 %v1019, %v941
        %v1072 = vmul.f32 %v1019, %v943
        %v1073 = vmul.f32 %v1019, %v945
        %v1074 = vmul.f32 %v1019, %v947
        %v1075 = vmul.f32 %v1019, %v949
        %v1076 = vmul.f32 %v1023, %v951
        %v1077 = vmul.f32 %v1023, %v953
        %v1078 = vmul.f32 %v1023, %v955
        %v1079 = vmul.f32 %v1023, %v957
        %v1080 = vmul.f32 %v1023, %v959
        %v1081 = vmul.f32 %v1023, %v961
        %v1082 = vmul.f32 %v1023, %v963
        %v1083 = vmul.f32 %v1023, %v965
        %v1084 = vmul.f32 %v1023, %v967
        %v1085 = vmul.f32 %v1023, %v969
        %v1086 = vmul.f32 %v1023, %v971
        %v1087 = vmul.f32 %v1023, %v973
        %v1088 = vmul.f32 %v1023, %v975
        %v1089 = vmul.f32 %v1023, %v977
        %v1090 = vmul.f32 %v1023, %v979
        %v1091 = vmul.f32 %v1023, %v981
        %1092 = vadd.xlane.f32.xlu0 %v1028
        %v1093 = vpop.xlane.xlu0 %1092
        %1094 = vadd.xlane.f32.xlu0 %v1029
        %v1095 = vpop.xlane.xlu0 %1094
        %1096 = vadd.xlane.f32.xlu0 %v1030
        %v1097 = vpop.xlane.xlu0 %1096
        %1098 = vadd.xlane.f32.xlu0 %v1031
        %v1099 = vpop.xlane.xlu0 %1098
        %1100 = vadd.xlane.f32.xlu0 %v1032
        %v1101 = vpop.xlane.xlu0 %1100
        %1102 = vadd.xlane.f32.xlu0 %v1033
        %v1103 = vpop.xlane.xlu0 %1102
        %1104 = vadd.xlane.f32.xlu0 %v1034
        %v1105 = vpop.xlane.xlu0 %1104
        %1106 = vadd.xlane.f32.xlu0 %v1035
        %v1107 = vpop.xlane.xlu0 %1106
        %1108 = vadd.xlane.f32.xlu0 %v1036
        %v1109 = vpop.xlane.xlu0 %1108
        %1110 = vadd.xlane.f32.xlu0 %v1037
        %v1111 = vpop.xlane.xlu0 %1110
        %1112 = vadd.xlane.f32.xlu0 %v1038
        %v1113 = vpop.xlane.xlu0 %1112
        %1114 = vadd.xlane.f32.xlu0 %v1039
        %v1115 = vpop.xlane.xlu0 %1114
        %1116 = vadd.xlane.f32.xlu0 %v1040
        %v1117 = vpop.xlane.xlu0 %1116
        %1118 = vadd.xlane.f32.xlu0 %v1041
        %v1119 = vpop.xlane.xlu0 %1118
        %1120 = vadd.xlane.f32.xlu0 %v1042
        %v1121 = vpop.xlane.xlu0 %1120
        %1122 = vadd.xlane.f32.xlu0 %v1043
        %v1123 = vpop.xlane.xlu0 %1122
        %1124 = vadd.xlane.f32.xlu0 %v1044
        %v1125 = vpop.xlane.xlu0 %1124
        %1126 = vadd.xlane.f32.xlu0 %v1045
        %v1127 = vpop.xlane.xlu0 %1126
        %1128 = vadd.xlane.f32.xlu0 %v1046
        %v1129 = vpop.xlane.xlu0 %1128
        %1130 = vadd.xlane.f32.xlu0 %v1047
        %v1131 = vpop.xlane.xlu0 %1130
        %1132 = vadd.xlane.f32.xlu0 %v1048
        %v1133 = vpop.xlane.xlu0 %1132
        %1134 = vadd.xlane.f32.xlu0 %v1049
        %v1135 = vpop.xlane.xlu0 %1134
        %1136 = vadd.xlane.f32.xlu0 %v1050
        %v1137 = vpop.xlane.xlu0 %1136
        %1138 = vadd.xlane.f32.xlu0 %v1051
        %v1139 = vpop.xlane.xlu0 %1138
        %1140 = vadd.xlane.f32.xlu0 %v1052
        %v1141 = vpop.xlane.xlu0 %1140
        %1142 = vadd.xlane.f32.xlu0 %v1053
        %v1143 = vpop.xlane.xlu0 %1142
        %1144 = vadd.xlane.f32.xlu0 %v1054
        %v1145 = vpop.xlane.xlu0 %1144
        %1146 = vadd.xlane.f32.xlu0 %v1055
        %v1147 = vpop.xlane.xlu0 %1146
        %1148 = vadd.xlane.f32.xlu0 %v1056
        %v1149 = vpop.xlane.xlu0 %1148
        %1150 = vadd.xlane.f32.xlu0 %v1057
        %v1151 = vpop.xlane.xlu0 %1150
        %1152 = vadd.xlane.f32.xlu0 %v1058
        %v1153 = vpop.xlane.xlu0 %1152
        %1154 = vadd.xlane.f32.xlu0 %v1059
        %v1155 = vpop.xlane.xlu0 %1154
        %1156 = vadd.xlane.f32.xlu0 %v1060
        %v1157 = vpop.xlane.xlu0 %1156
        %1158 = vadd.xlane.f32.xlu0 %v1061
        %v1159 = vpop.xlane.xlu0 %1158
        %1160 = vadd.xlane.f32.xlu0 %v1062
        %v1161 = vpop.xlane.xlu0 %1160
        %1162 = vadd.xlane.f32.xlu0 %v1063
        %v1163 = vpop.xlane.xlu0 %1162
        %1164 = vadd.xlane.f32.xlu0 %v1064
        %v1165 = vpop.xlane.xlu0 %1164
        %1166 = vadd.xlane.f32.xlu0 %v1065
        %v1167 = vpop.xlane.xlu0 %1166
        %1168 = vadd.xlane.f32.xlu0 %v1066
        %v1169 = vpop.xlane.xlu0 %1168
        %1170 = vadd.xlane.f32.xlu0 %v1067
        %v1171 = vpop.xlane.xlu0 %1170
        %1172 = vadd.xlane.f32.xlu0 %v1068
        %v1173 = vpop.xlane.xlu0 %1172
        %1174 = vadd.xlane.f32.xlu0 %v1069
        %v1175 = vpop.xlane.xlu0 %1174
        %1176 = vadd.xlane.f32.xlu0 %v1070
        %v1177 = vpop.xlane.xlu0 %1176
        %1178 = vadd.xlane.f32.xlu0 %v1071
        %v1179 = vpop.xlane.xlu0 %1178
        %1180 = vadd.xlane.f32.xlu0 %v1072
        %v1181 = vpop.xlane.xlu0 %1180
        %1182 = vadd.xlane.f32.xlu0 %v1073
        %v1183 = vpop.xlane.xlu0 %1182
        %1184 = vadd.xlane.f32.xlu0 %v1074
        %v1185 = vpop.xlane.xlu0 %1184
        %1186 = vadd.xlane.f32.xlu0 %v1075
        %v1187 = vpop.xlane.xlu0 %1186
        %1188 = vadd.xlane.f32.xlu0 %v1076
        %v1189 = vpop.xlane.xlu0 %1188
        %1190 = vadd.xlane.f32.xlu0 %v1077
        %v1191 = vpop.xlane.xlu0 %1190
        %1192 = vadd.xlane.f32.xlu0 %v1078
        %v1193 = vpop.xlane.xlu0 %1192
        %1194 = vadd.xlane.f32.xlu0 %v1079
        %v1195 = vpop.xlane.xlu0 %1194
        %1196 = vadd.xlane.f32.xlu0 %v1080
        %v1197 = vpop.xlane.xlu0 %1196
        %1198 = vadd.xlane.f32.xlu0 %v1081
        %v1199 = vpop.xlane.xlu0 %1198
        %1200 = vadd.xlane.f32.xlu0 %v1082
        %v1201 = vpop.xlane.xlu0 %1200
        %1202 = vadd.xlane.f32.xlu0 %v1083
        %v1203 = vpop.xlane.xlu0 %1202
        %1204 = vadd.xlane.f32.xlu0 %v1084
        %v1205 = vpop.xlane.xlu0 %1204
        %1206 = vadd.xlane.f32.xlu0 %v1085
        %v1207 = vpop.xlane.xlu0 %1206
        %1208 = vadd.xlane.f32.xlu0 %v1086
        %v1209 = vpop.xlane.xlu0 %1208
        %1210 = vadd.xlane.f32.xlu0 %v1087
        %v1211 = vpop.xlane.xlu0 %1210
        %1212 = vadd.xlane.f32.xlu0 %v1088
        %v1213 = vpop.xlane.xlu0 %1212
        %1214 = vadd.xlane.f32.xlu0 %v1089
        %v1215 = vpop.xlane.xlu0 %1214
        %1216 = vadd.xlane.f32.xlu0 %v1090
        %v1217 = vpop.xlane.xlu0 %1216
        %1218 = vadd.xlane.f32.xlu0 %v1091
        %v1219 = vpop.xlane.xlu0 %1218
        %v1220 = vld [vmem:[%s316] sm:$0xf]
        %v1285 = vlaneseq
        %v1286 = vand.u32 %v1285, 127
        %v1287 = vlaneseq
        %v1288 = vshrl.u32 %v1287, 7
        %v1289 = vsub.s32 %v1286, %v1288
        %v1290 = vrot.slane %v1093, %v1289
        %v1291 = vadd.s32 %v1286, 4294967288
        %v1292 = vlaneseq
        %v1293 = vshrl.u32 %v1292, 7
        %v1294 = vsub.s32 %v1291, %v1293
        %v1295 = vrot.slane %v1095, %v1294
        %vm1296 = vcmask 130112
        %v1297 = vsel %vm1296, %v1295, %v1290
        %v1298 = vadd.s32 %v1286, 4294967280
        %v1299 = vlaneseq
        %v1300 = vshrl.u32 %v1299, 7
        %v1301 = vsub.s32 %v1298, %v1300
        %v1302 = vrot.slane %v1097, %v1301
        %vm1303 = vcmask 195712
        %v1304 = vsel %vm1303, %v1302, %v1297
        %v1305 = vadd.s32 %v1286, 4294967272
        %v1306 = vlaneseq
        %v1307 = vshrl.u32 %v1306, 7
        %v1308 = vsub.s32 %v1305, %v1307
        %v1309 = vrot.slane %v1099, %v1308
        %vm1310 = vcmask 261312
        %v1311 = vsel %vm1310, %v1309, %v1304
        %v1312 = vadd.s32 %v1286, 4294967264
        %v1313 = vlaneseq
        %v1314 = vshrl.u32 %v1313, 7
        %v1315 = vsub.s32 %v1312, %v1314
        %v1316 = vrot.slane %v1101, %v1315
        %vm1317 = vcmask 326912
        %v1318 = vsel %vm1317, %v1316, %v1311
        %v1319 = vadd.s32 %v1286, 4294967256
        %v1320 = vlaneseq
        %v1321 = vshrl.u32 %v1320, 7
        %v1322 = vsub.s32 %v1319, %v1321
        %v1323 = vrot.slane %v1103, %v1322
        %vm1324 = vcmask 392512
        %v1325 = vsel %vm1324, %v1323, %v1318
        %v1326 = vadd.s32 %v1286, 4294967248
        %v1327 = vlaneseq
        %v1328 = vshrl.u32 %v1327, 7
        %v1329 = vsub.s32 %v1326, %v1328
        %v1330 = vrot.slane %v1105, %v1329
        %vm1331 = vcmask 458112
        %v1332 = vsel %vm1331, %v1330, %v1325
        %v1333 = vadd.s32 %v1286, 4294967240
        %v1334 = vlaneseq
        %v1335 = vshrl.u32 %v1334, 7
        %v1336 = vsub.s32 %v1333, %v1335
        %v1337 = vrot.slane %v1107, %v1336
        %vm1338 = vcmask 523712
        %v1339 = vsel %vm1338, %v1337, %v1332
        %v1340 = vadd.s32 %v1286, 4294967232
        %v1341 = vlaneseq
        %v1342 = vshrl.u32 %v1341, 7
        %v1343 = vsub.s32 %v1340, %v1342
        %v1344 = vrot.slane %v1109, %v1343
        %vm1345 = vcmask 589312
        %v1346 = vsel %vm1345, %v1344, %v1339
        %v1347 = vadd.s32 %v1286, 4294967224
        %v1348 = vlaneseq
        %v1349 = vshrl.u32 %v1348, 7
        %v1350 = vsub.s32 %v1347, %v1349
        %v1351 = vrot.slane %v1111, %v1350
        %vm1352 = vcmask 654912
        %v1353 = vsel %vm1352, %v1351, %v1346
        %v1354 = vadd.s32 %v1286, 4294967216
        %v1355 = vlaneseq
        %v1356 = vshrl.u32 %v1355, 7
        %v1357 = vsub.s32 %v1354, %v1356
        %v1358 = vrot.slane %v1113, %v1357
        %vm1359 = vcmask 720512
        %v1360 = vsel %vm1359, %v1358, %v1353
        %v1361 = vadd.s32 %v1286, 4294967208
        %v1362 = vlaneseq
        %v1363 = vshrl.u32 %v1362, 7
        %v1364 = vsub.s32 %v1361, %v1363
        %v1365 = vrot.slane %v1115, %v1364
        %vm1366 = vcmask 786112
        %v1367 = vsel %vm1366, %v1365, %v1360
        %v1368 = vadd.s32 %v1286, 4294967200
        %v1369 = vlaneseq
        %v1370 = vshrl.u32 %v1369, 7
        %v1371 = vsub.s32 %v1368, %v1370
        %v1372 = vrot.slane %v1117, %v1371
        %vm1373 = vcmask 851712
        %v1374 = vsel %vm1373, %v1372, %v1367
        %v1375 = vadd.s32 %v1286, 4294967192
        %v1376 = vlaneseq
        %v1377 = vshrl.u32 %v1376, 7
        %v1378 = vsub.s32 %v1375, %v1377
        %v1379 = vrot.slane %v1119, %v1378
        %vm1380 = vcmask 917312
        %v1381 = vsel %vm1380, %v1379, %v1374
        %v1382 = vadd.s32 %v1286, 4294967184
        %v1383 = vlaneseq
        %v1384 = vshrl.u32 %v1383, 7
        %v1385 = vsub.s32 %v1382, %v1384
        %v1386 = vrot.slane %v1121, %v1385
        %vm1387 = vcmask 982912
        %v1388 = vsel %vm1387, %v1386, %v1381
        %v1389 = vadd.s32 %v1286, 4294967176
        %v1390 = vlaneseq
        %v1391 = vshrl.u32 %v1390, 7
        %v1392 = vsub.s32 %v1389, %v1391
        %v1393 = vrot.slane %v1123, %v1392
        %vm1394 = vcmask 1048512
        %v1395 = vsel %vm1394, %v1393, %v1388
        %v1396 = vlaneseq
        %v1397 = vshrl.u32 %v1396, 7
        %v1398 = vsub.s32 %v1286, %v1397
        %v1399 = vrot.slane %v1125, %v1398
        %v1400 = vlaneseq
        %v1401 = vshrl.u32 %v1400, 7
        %v1402 = vsub.s32 %v1291, %v1401
        %v1403 = vrot.slane %v1127, %v1402
        %v1404 = vsel %vm1296, %v1403, %v1399
        %v1405 = vlaneseq
        %v1406 = vshrl.u32 %v1405, 7
        %v1407 = vsub.s32 %v1298, %v1406
        %v1408 = vrot.slane %v1129, %v1407
        %v1409 = vsel %vm1303, %v1408, %v1404
        %v1410 = vlaneseq
        %v1411 = vshrl.u32 %v1410, 7
        %v1412 = vsub.s32 %v1305, %v1411
        %v1413 = vrot.slane %v1131, %v1412
        %v1414 = vsel %vm1310, %v1413, %v1409
        %v1415 = vlaneseq
        %v1416 = vshrl.u32 %v1415, 7
        %v1417 = vsub.s32 %v1312, %v1416
        %v1418 = vrot.slane %v1133, %v1417
        %v1419 = vsel %vm1317, %v1418, %v1414
        %v1420 = vlaneseq
        %v1421 = vshrl.u32 %v1420, 7
        %v1422 = vsub.s32 %v1319, %v1421
        %v1423 = vrot.slane %v1135, %v1422
        %v1424 = vsel %vm1324, %v1423, %v1419
        %v1425 = vlaneseq
        %v1426 = vshrl.u32 %v1425, 7
        %v1427 = vsub.s32 %v1326, %v1426
        %v1428 = vrot.slane %v1137, %v1427
        %v1429 = vsel %vm1331, %v1428, %v1424
        %v1430 = vlaneseq
        %v1431 = vshrl.u32 %v1430, 7
        %v1432 = vsub.s32 %v1333, %v1431
        %v1433 = vrot.slane %v1139, %v1432
        %v1434 = vsel %vm1338, %v1433, %v1429
        %v1435 = vlaneseq
        %v1436 = vshrl.u32 %v1435, 7
        %v1437 = vsub.s32 %v1340, %v1436
        %v1438 = vrot.slane %v1141, %v1437
        %v1439 = vsel %vm1345, %v1438, %v1434
        %v1440 = vlaneseq
        %v1441 = vshrl.u32 %v1440, 7
        %v1442 = vsub.s32 %v1347, %v1441
        %v1443 = vrot.slane %v1143, %v1442
        %v1444 = vsel %vm1352, %v1443, %v1439
        %v1445 = vlaneseq
        %v1446 = vshrl.u32 %v1445, 7
        %v1447 = vsub.s32 %v1354, %v1446
        %v1448 = vrot.slane %v1145, %v1447
        %v1449 = vsel %vm1359, %v1448, %v1444
        %v1450 = vlaneseq
        %v1451 = vshrl.u32 %v1450, 7
        %v1452 = vsub.s32 %v1361, %v1451
        %v1453 = vrot.slane %v1147, %v1452
        %v1454 = vsel %vm1366, %v1453, %v1449
        %v1455 = vlaneseq
        %v1456 = vshrl.u32 %v1455, 7
        %v1457 = vsub.s32 %v1368, %v1456
        %v1458 = vrot.slane %v1149, %v1457
        %v1459 = vsel %vm1373, %v1458, %v1454
        %v1460 = vlaneseq
        %v1461 = vshrl.u32 %v1460, 7
        %v1462 = vsub.s32 %v1375, %v1461
        %v1463 = vrot.slane %v1151, %v1462
        %v1464 = vsel %vm1380, %v1463, %v1459
        %v1465 = vlaneseq
        %v1466 = vshrl.u32 %v1465, 7
        %v1467 = vsub.s32 %v1382, %v1466
        %v1468 = vrot.slane %v1153, %v1467
        %v1469 = vsel %vm1387, %v1468, %v1464
        %v1470 = vlaneseq
        %v1471 = vshrl.u32 %v1470, 7
        %v1472 = vsub.s32 %v1389, %v1471
        %v1473 = vrot.slane %v1155, %v1472
        %v1474 = vsel %vm1394, %v1473, %v1469
        %v1475 = vlaneseq
        %v1476 = vshrl.u32 %v1475, 7
        %v1477 = vsub.s32 %v1286, %v1476
        %v1478 = vrot.slane %v1157, %v1477
        %v1479 = vlaneseq
        %v1480 = vshrl.u32 %v1479, 7
        %v1481 = vsub.s32 %v1291, %v1480
        %v1482 = vrot.slane %v1159, %v1481
        %v1483 = vsel %vm1296, %v1482, %v1478
        %v1484 = vlaneseq
        %v1485 = vshrl.u32 %v1484, 7
        %v1486 = vsub.s32 %v1298, %v1485
        %v1487 = vrot.slane %v1161, %v1486
        %v1488 = vsel %vm1303, %v1487, %v1483
        %v1489 = vlaneseq
        %v1490 = vshrl.u32 %v1489, 7
        %v1491 = vsub.s32 %v1305, %v1490
        %v1492 = vrot.slane %v1163, %v1491
        %v1493 = vsel %vm1310, %v1492, %v1488
        %v1494 = vlaneseq
        %v1495 = vshrl.u32 %v1494, 7
        %v1496 = vsub.s32 %v1312, %v1495
        %v1497 = vrot.slane %v1165, %v1496
        %v1498 = vsel %vm1317, %v1497, %v1493
        %v1499 = vlaneseq
        %v1500 = vshrl.u32 %v1499, 7
        %v1501 = vsub.s32 %v1319, %v1500
        %v1502 = vrot.slane %v1167, %v1501
        %v1503 = vsel %vm1324, %v1502, %v1498
        %v1504 = vlaneseq
        %v1505 = vshrl.u32 %v1504, 7
        %v1506 = vsub.s32 %v1326, %v1505
        %v1507 = vrot.slane %v1169, %v1506
        %v1508 = vsel %vm1331, %v1507, %v1503
        %v1509 = vlaneseq
        %v1510 = vshrl.u32 %v1509, 7
        %v1511 = vsub.s32 %v1333, %v1510
        %v1512 = vrot.slane %v1171, %v1511
        %v1513 = vsel %vm1338, %v1512, %v1508
        %v1514 = vlaneseq
        %v1515 = vshrl.u32 %v1514, 7
        %v1516 = vsub.s32 %v1340, %v1515
        %v1517 = vrot.slane %v1173, %v1516
        %v1518 = vsel %vm1345, %v1517, %v1513
        %v1519 = vlaneseq
        %v1520 = vshrl.u32 %v1519, 7
        %v1521 = vsub.s32 %v1347, %v1520
        %v1522 = vrot.slane %v1175, %v1521
        %v1523 = vsel %vm1352, %v1522, %v1518
        %v1524 = vlaneseq
        %v1525 = vshrl.u32 %v1524, 7
        %v1526 = vsub.s32 %v1354, %v1525
        %v1527 = vrot.slane %v1177, %v1526
        %v1528 = vsel %vm1359, %v1527, %v1523
        %v1529 = vlaneseq
        %v1530 = vshrl.u32 %v1529, 7
        %v1531 = vsub.s32 %v1361, %v1530
        %v1532 = vrot.slane %v1179, %v1531
        %v1533 = vsel %vm1366, %v1532, %v1528
        %v1534 = vlaneseq
        %v1535 = vshrl.u32 %v1534, 7
        %v1536 = vsub.s32 %v1368, %v1535
        %v1537 = vrot.slane %v1181, %v1536
        %v1538 = vsel %vm1373, %v1537, %v1533
        %v1539 = vlaneseq
        %v1540 = vshrl.u32 %v1539, 7
        %v1541 = vsub.s32 %v1375, %v1540
        %v1542 = vrot.slane %v1183, %v1541
        %v1543 = vsel %vm1380, %v1542, %v1538
        %v1544 = vlaneseq
        %v1545 = vshrl.u32 %v1544, 7
        %v1546 = vsub.s32 %v1382, %v1545
        %v1547 = vrot.slane %v1185, %v1546
        %v1548 = vsel %vm1387, %v1547, %v1543
        %v1549 = vlaneseq
        %v1550 = vshrl.u32 %v1549, 7
        %v1551 = vsub.s32 %v1389, %v1550
        %v1552 = vrot.slane %v1187, %v1551
        %v1553 = vsel %vm1394, %v1552, %v1548
        %v1554 = vlaneseq
        %v1555 = vshrl.u32 %v1554, 7
        %v1556 = vsub.s32 %v1286, %v1555
        %v1557 = vrot.slane %v1189, %v1556
        %v1558 = vlaneseq
        %v1559 = vshrl.u32 %v1558, 7
        %v1560 = vsub.s32 %v1291, %v1559
        %v1561 = vrot.slane %v1191, %v1560
        %v1562 = vsel %vm1296, %v1561, %v1557
        %v1563 = vlaneseq
        %v1564 = vshrl.u32 %v1563, 7
        %v1565 = vsub.s32 %v1298, %v1564
        %v1566 = vrot.slane %v1193, %v1565
        %v1567 = vsel %vm1303, %v1566, %v1562
        %v1568 = vlaneseq
        %v1569 = vshrl.u32 %v1568, 7
        %v1570 = vsub.s32 %v1305, %v1569
        %v1571 = vrot.slane %v1195, %v1570
        %v1572 = vsel %vm1310, %v1571, %v1567
        %v1573 = vlaneseq
        %v1574 = vshrl.u32 %v1573, 7
        %v1575 = vsub.s32 %v1312, %v1574
        %v1576 = vrot.slane %v1197, %v1575
        %v1577 = vsel %vm1317, %v1576, %v1572
        %v1578 = vlaneseq
        %v1579 = vshrl.u32 %v1578, 7
        %v1580 = vsub.s32 %v1319, %v1579
        %v1581 = vrot.slane %v1199, %v1580
        %v1582 = vsel %vm1324, %v1581, %v1577
        %v1583 = vlaneseq
        %v1584 = vshrl.u32 %v1583, 7
        %v1585 = vsub.s32 %v1326, %v1584
        %v1586 = vrot.slane %v1201, %v1585
        %v1587 = vsel %vm1331, %v1586, %v1582
        %v1588 = vlaneseq
        %v1589 = vshrl.u32 %v1588, 7
        %v1590 = vsub.s32 %v1333, %v1589
        %v1591 = vrot.slane %v1203, %v1590
        %v1592 = vsel %vm1338, %v1591, %v1587
        %v1593 = vlaneseq
        %v1594 = vshrl.u32 %v1593, 7
        %v1595 = vsub.s32 %v1340, %v1594
        %v1596 = vrot.slane %v1205, %v1595
        %v1597 = vsel %vm1345, %v1596, %v1592
        %v1598 = vlaneseq
        %v1599 = vshrl.u32 %v1598, 7
        %v1600 = vsub.s32 %v1347, %v1599
        %v1601 = vrot.slane %v1207, %v1600
        %v1602 = vsel %vm1352, %v1601, %v1597
        %v1603 = vlaneseq
        %v1604 = vshrl.u32 %v1603, 7
        %v1605 = vsub.s32 %v1354, %v1604
        %v1606 = vrot.slane %v1209, %v1605
        %v1607 = vsel %vm1359, %v1606, %v1602
        %v1608 = vlaneseq
        %v1609 = vshrl.u32 %v1608, 7
        %v1610 = vsub.s32 %v1361, %v1609
        %v1611 = vrot.slane %v1211, %v1610
        %v1612 = vsel %vm1366, %v1611, %v1607
        %v1613 = vlaneseq
        %v1614 = vshrl.u32 %v1613, 7
        %v1615 = vsub.s32 %v1368, %v1614
        %v1616 = vrot.slane %v1213, %v1615
        %v1617 = vsel %vm1373, %v1616, %v1612
        %v1618 = vlaneseq
        %v1619 = vshrl.u32 %v1618, 7
        %v1620 = vsub.s32 %v1375, %v1619
        %v1621 = vrot.slane %v1215, %v1620
        %v1622 = vsel %vm1380, %v1621, %v1617
        %v1623 = vlaneseq
        %v1624 = vshrl.u32 %v1623, 7
        %v1625 = vsub.s32 %v1382, %v1624
        %v1626 = vrot.slane %v1217, %v1625
        %v1627 = vsel %vm1387, %v1626, %v1622
        %v1628 = vlaneseq
        %v1629 = vshrl.u32 %v1628, 7
        %v1630 = vsub.s32 %v1389, %v1629
        %v1631 = vrot.slane %v1219, %v1630
        %v1632 = vsel %vm1394, %v1631, %v1627
        %vm1633 = vcmask 1041409
        %v1634 = vsel %vm1633, %v1474, %v1395
        %vm1635 = vcmask 1042434
        %v1636 = vsel %vm1635, %v1553, %v1634
        %vm1637 = vcmask 1043459
        %v1638 = vsel %vm1637, %v1632, %v1636
        %v1640 = vadd.f32 %v1220, %v1638
        %1641 = vst [vmem:[%s316] sm:$0xf] %v1640
        %v1642 = vld [vmem:[%s3 + $0x1] sm:$0x1]
        %v1643 = vlaneseq
        %v1644 = vshrl.u32 %v1643, 7
        %v1645 = vsub.s32 0, %v1644
        %v1646 = vrot.slane %v1642, %v1645
        %1648 = vbcast.lane.b32.xlu0 %v1646, 256
        %v1649 = vpop.permute.xlu0 %1648
        %v1650 = vlaneseq
        %v1651 = vshrl.u32 %v1650, 7
        %v1652 = vsub.s32 0, %v1651
        %v1653 = vrot.slane %v1649, %v1652
        %v1654 = vlaneseq
        %v1655 = vshrl.u32 %v1654, 7
        %v1656 = vsub.s32 1, %v1655
        %v1657 = vrot.slane %v1649, %v1656
        %v1658 = vlaneseq
        %v1659 = vshrl.u32 %v1658, 7
        %v1660 = vsub.s32 2, %v1659
        %v1661 = vrot.slane %v1649, %v1660
        %v1662 = vlaneseq
        %v1663 = vshrl.u32 %v1662, 7
        %v1664 = vsub.s32 3, %v1663
        %v1665 = vrot.slane %v1649, %v1664
        %v1666 = vmul.f32 %v1653, %v702
        %v1667 = vmul.f32 %v1653, %v703
        %v1668 = vmul.f32 %v1653, %v704
        %v1669 = vmul.f32 %v1653, %v705
        %v1670 = vmul.f32 %v1653, %v706
        %v1671 = vmul.f32 %v1653, %v707
        %v1672 = vmul.f32 %v1653, %v708
        %v1673 = vmul.f32 %v1653, %v709
        %v1674 = vmul.f32 %v1653, %v710
        %v1675 = vmul.f32 %v1653, %v711
        %v1676 = vmul.f32 %v1653, %v712
        %v1677 = vmul.f32 %v1653, %v713
        %v1678 = vmul.f32 %v1653, %v714
        %v1679 = vmul.f32 %v1653, %v715
        %v1680 = vmul.f32 %v1653, %v716
        %v1681 = vmul.f32 %v1653, %v717
        %v1682 = vmul.f32 %v1657, %v718
        %v1683 = vmul.f32 %v1657, %v719
        %v1684 = vmul.f32 %v1657, %v720
        %v1685 = vmul.f32 %v1657, %v721
        %v1686 = vmul.f32 %v1657, %v722
        %v1687 = vmul.f32 %v1657, %v723
        %v1688 = vmul.f32 %v1657, %v724
        %v1689 = vmul.f32 %v1657, %v725
        %v1690 = vmul.f32 %v1657, %v726
        %v1691 = vmul.f32 %v1657, %v727
        %v1692 = vmul.f32 %v1657, %v728
        %v1693 = vmul.f32 %v1657, %v729
        %v1694 = vmul.f32 %v1657, %v730
        %v1695 = vmul.f32 %v1657, %v731
        %v1696 = vmul.f32 %v1657, %v732
        %v1697 = vmul.f32 %v1657, %v733
        %v1698 = vmul.f32 %v1661, %v734
        %v1699 = vmul.f32 %v1661, %v735
        %v1700 = vmul.f32 %v1661, %v736
        %v1701 = vmul.f32 %v1661, %v737
        %v1702 = vmul.f32 %v1661, %v738
        %v1703 = vmul.f32 %v1661, %v739
        %v1704 = vmul.f32 %v1661, %v740
        %v1705 = vmul.f32 %v1661, %v741
        %v1706 = vmul.f32 %v1661, %v742
        %v1707 = vmul.f32 %v1661, %v743
        %v1708 = vmul.f32 %v1661, %v744
        %v1709 = vmul.f32 %v1661, %v745
        %v1710 = vmul.f32 %v1661, %v746
        %v1711 = vmul.f32 %v1661, %v747
        %v1712 = vmul.f32 %v1661, %v748
        %v1713 = vmul.f32 %v1661, %v749
        %v1714 = vmul.f32 %v1665, %v750
        %v1715 = vmul.f32 %v1665, %v751
        %v1716 = vmul.f32 %v1665, %v752
        %v1717 = vmul.f32 %v1665, %v753
        %v1718 = vmul.f32 %v1665, %v754
        %v1719 = vmul.f32 %v1665, %v755
        %v1720 = vmul.f32 %v1665, %v756
        %v1721 = vmul.f32 %v1665, %v757
        %v1722 = vmul.f32 %v1665, %v758
        %v1723 = vmul.f32 %v1665, %v759
        %v1724 = vmul.f32 %v1665, %v760
        %v1725 = vmul.f32 %v1665, %v761
        %v1726 = vmul.f32 %v1665, %v762
        %v1727 = vmul.f32 %v1665, %v763
        %v1728 = vmul.f32 %v1665, %v764
        %v1729 = vmul.f32 %v1665, %v765
        %v1730 = vmul.f32 %v1666, 1.442695
        %v1731 = vpow.pop %v1730
        %v1732 = vmul.f32 %v1667, 1.442695
        %v1733 = vpow.pop %v1732
        %v1734 = vmul.f32 %v1668, 1.442695
        %v1735 = vpow.pop %v1734
        %v1736 = vmul.f32 %v1669, 1.442695
        %v1737 = vpow.pop %v1736
        %v1738 = vmul.f32 %v1670, 1.442695
        %v1739 = vpow.pop %v1738
        %v1740 = vmul.f32 %v1671, 1.442695
        %v1741 = vpow.pop %v1740
        %v1742 = vmul.f32 %v1672, 1.442695
        %v1743 = vpow.pop %v1742
        %v1744 = vmul.f32 %v1673, 1.442695
        %v1745 = vpow.pop %v1744
        %v1746 = vmul.f32 %v1674, 1.442695
        %v1747 = vpow.pop %v1746
        %v1748 = vmul.f32 %v1675, 1.442695
        %v1749 = vpow.pop %v1748
        %v1750 = vmul.f32 %v1676, 1.442695
        %v1751 = vpow.pop %v1750
        %v1752 = vmul.f32 %v1677, 1.442695
        %v1753 = vpow.pop %v1752
        %v1754 = vmul.f32 %v1678, 1.442695
        %v1755 = vpow.pop %v1754
        %v1756 = vmul.f32 %v1679, 1.442695
        %v1757 = vpow.pop %v1756
        %v1758 = vmul.f32 %v1680, 1.442695
        %v1759 = vpow.pop %v1758
        %v1760 = vmul.f32 %v1681, 1.442695
        %v1761 = vpow.pop %v1760
        %v1762 = vmul.f32 %v1682, 1.442695
        %v1763 = vpow.pop %v1762
        %v1764 = vmul.f32 %v1683, 1.442695
        %v1765 = vpow.pop %v1764
        %v1766 = vmul.f32 %v1684, 1.442695
        %v1767 = vpow.pop %v1766
        %v1768 = vmul.f32 %v1685, 1.442695
        %v1769 = vpow.pop %v1768
        %v1770 = vmul.f32 %v1686, 1.442695
        %v1771 = vpow.pop %v1770
        %v1772 = vmul.f32 %v1687, 1.442695
        %v1773 = vpow.pop %v1772
        %v1774 = vmul.f32 %v1688, 1.442695
        %v1775 = vpow.pop %v1774
        %v1776 = vmul.f32 %v1689, 1.442695
        %v1777 = vpow.pop %v1776
        %v1778 = vmul.f32 %v1690, 1.442695
        %v1779 = vpow.pop %v1778
        %v1780 = vmul.f32 %v1691, 1.442695
        %v1781 = vpow.pop %v1780
        %v1782 = vmul.f32 %v1692, 1.442695
        %v1783 = vpow.pop %v1782
        %v1784 = vmul.f32 %v1693, 1.442695
        %v1785 = vpow.pop %v1784
        %v1786 = vmul.f32 %v1694, 1.442695
        %v1787 = vpow.pop %v1786
        %v1788 = vmul.f32 %v1695, 1.442695
        %v1789 = vpow.pop %v1788
        %v1790 = vmul.f32 %v1696, 1.442695
        %v1791 = vpow.pop %v1790
        %v1792 = vmul.f32 %v1697, 1.442695
        %v1793 = vpow.pop %v1792
        %v1794 = vmul.f32 %v1698, 1.442695
        %v1795 = vpow.pop %v1794
        %v1796 = vmul.f32 %v1699, 1.442695
        %v1797 = vpow.pop %v1796
        %v1798 = vmul.f32 %v1700, 1.442695
        %v1799 = vpow.pop %v1798
        %v1800 = vmul.f32 %v1701, 1.442695
        %v1801 = vpow.pop %v1800
        %v1802 = vmul.f32 %v1702, 1.442695
        %v1803 = vpow.pop %v1802
        %v1804 = vmul.f32 %v1703, 1.442695
        %v1805 = vpow.pop %v1804
        %v1806 = vmul.f32 %v1704, 1.442695
        %v1807 = vpow.pop %v1806
        %v1808 = vmul.f32 %v1705, 1.442695
        %v1809 = vpow.pop %v1808
        %v1810 = vmul.f32 %v1706, 1.442695
        %v1811 = vpow.pop %v1810
        %v1812 = vmul.f32 %v1707, 1.442695
        %v1813 = vpow.pop %v1812
        %v1814 = vmul.f32 %v1708, 1.442695
        %v1815 = vpow.pop %v1814
        %v1816 = vmul.f32 %v1709, 1.442695
        %v1817 = vpow.pop %v1816
        %v1818 = vmul.f32 %v1710, 1.442695
        %v1819 = vpow.pop %v1818
        %v1820 = vmul.f32 %v1711, 1.442695
        %v1821 = vpow.pop %v1820
        %v1822 = vmul.f32 %v1712, 1.442695
        %v1823 = vpow.pop %v1822
        %v1824 = vmul.f32 %v1713, 1.442695
        %v1825 = vpow.pop %v1824
        %v1826 = vmul.f32 %v1714, 1.442695
        %v1827 = vpow.pop %v1826
        %v1828 = vmul.f32 %v1715, 1.442695
        %v1829 = vpow.pop %v1828
        %v1830 = vmul.f32 %v1716, 1.442695
        %v1831 = vpow.pop %v1830
        %v1832 = vmul.f32 %v1717, 1.442695
        %v1833 = vpow.pop %v1832
        %v1834 = vmul.f32 %v1718, 1.442695
        %v1835 = vpow.pop %v1834
        %v1836 = vmul.f32 %v1719, 1.442695
        %v1837 = vpow.pop %v1836
        %v1838 = vmul.f32 %v1720, 1.442695
        %v1839 = vpow.pop %v1838
        %v1840 = vmul.f32 %v1721, 1.442695
        %v1841 = vpow.pop %v1840
        %v1842 = vmul.f32 %v1722, 1.442695
        %v1843 = vpow.pop %v1842
        %v1844 = vmul.f32 %v1723, 1.442695
        %v1845 = vpow.pop %v1844
        %v1846 = vmul.f32 %v1724, 1.442695
        %v1847 = vpow.pop %v1846
        %v1848 = vmul.f32 %v1725, 1.442695
        %v1849 = vpow.pop %v1848
        %v1850 = vmul.f32 %v1726, 1.442695
        %v1851 = vpow.pop %v1850
        %v1852 = vmul.f32 %v1727, 1.442695
        %v1853 = vpow.pop %v1852
        %v1854 = vmul.f32 %v1728, 1.442695
        %v1855 = vpow.pop %v1854
        %v1856 = vmul.f32 %v1729, 1.442695
        %v1857 = vpow.pop %v1856
        %s1858 = scalar_lea.vmem %s282, 4 [#allocation7]
        %v1859 = vld [vmem:[%s1858] sm:$0xf]
        %v1862 = vunpack.c.l.s4 1966171168
        %v1863 = vunpack.c.0.s8 %v1862
        %v1864 = vlaneseq
        %v1865 = vshrl.u32 %v1864, 7
        %v1866 = vsub.s32 %v1863, %v1865
        %v1867 = vrot.slane %v1859, %v1866
        %v1868 = vcombine.high %v1867, %v1867
        %v1870 = vunpack.c.l.s4 1966171168
        %v1871 = vunpack.c.0.s8 %v1870
        %v1872 = vlaneseq
        %v1873 = vshrl.u32 %v1872, 7
        %v1874 = vsub.s32 %v1871, %v1873
        %v1875 = vrot.slane %v1867, %v1874
        %v1877 = vunpack.c.l.s4 1966171168
        %v1878 = vunpack.c.0.s8 %v1877
        %v1879 = vlaneseq
        %v1880 = vshrl.u32 %v1879, 7
        %v1881 = vsub.s32 %v1878, %v1880
        %v1882 = vrot.slane %v1868, %v1881
        %v1883 = vcombine.high %v1875, %v1875
        %v1884 = vcombine.high %v1882, %v1882
        %v1885 = vlaneseq
        %v1886 = vshrl.u32 %v1885, 7
        %v1887 = vsub.s32 0, %v1886
        %v1888 = vrot.slane %v1875, %v1887
        %v1889 = vlaneseq
        %v1890 = vshrl.u32 %v1889, 7
        %v1891 = vsub.s32 0, %v1890
        %v1892 = vrot.slane %v1882, %v1891
        %v1893 = vlaneseq
        %v1894 = vshrl.u32 %v1893, 7
        %v1895 = vsub.s32 0, %v1894
        %v1896 = vrot.slane %v1883, %v1895
        %v1897 = vlaneseq
        %v1898 = vshrl.u32 %v1897, 7
        %v1899 = vsub.s32 0, %v1898
        %v1900 = vrot.slane %v1884, %v1899
        %v1905 = vmul.f32 %v1888, %v1731
        %v1906 = vmul.f32 %v1888, %v1733
        %v1907 = vmul.f32 %v1888, %v1735
        %v1908 = vmul.f32 %v1888, %v1737
        %v1909 = vmul.f32 %v1888, %v1739
        %v1910 = vmul.f32 %v1888, %v1741
        %v1911 = vmul.f32 %v1888, %v1743
        %v1912 = vmul.f32 %v1888, %v1745
        %v1913 = vmul.f32 %v1888, %v1747
        %v1914 = vmul.f32 %v1888, %v1749
        %v1915 = vmul.f32 %v1888, %v1751
        %v1916 = vmul.f32 %v1888, %v1753
        %v1917 = vmul.f32 %v1888, %v1755
        %v1918 = vmul.f32 %v1888, %v1757
        %v1919 = vmul.f32 %v1888, %v1759
        %v1920 = vmul.f32 %v1888, %v1761
        %v1921 = vmul.f32 %v1892, %v1763
        %v1922 = vmul.f32 %v1892, %v1765
        %v1923 = vmul.f32 %v1892, %v1767
        %v1924 = vmul.f32 %v1892, %v1769
        %v1925 = vmul.f32 %v1892, %v1771
        %v1926 = vmul.f32 %v1892, %v1773
        %v1927 = vmul.f32 %v1892, %v1775
        %v1928 = vmul.f32 %v1892, %v1777
        %v1929 = vmul.f32 %v1892, %v1779
        %v1930 = vmul.f32 %v1892, %v1781
        %v1931 = vmul.f32 %v1892, %v1783
        %v1932 = vmul.f32 %v1892, %v1785
        %v1933 = vmul.f32 %v1892, %v1787
        %v1934 = vmul.f32 %v1892, %v1789
        %v1935 = vmul.f32 %v1892, %v1791
        %v1936 = vmul.f32 %v1892, %v1793
        %v1937 = vmul.f32 %v1896, %v1795
        %v1938 = vmul.f32 %v1896, %v1797
        %v1939 = vmul.f32 %v1896, %v1799
        %v1940 = vmul.f32 %v1896, %v1801
        %v1941 = vmul.f32 %v1896, %v1803
        %v1942 = vmul.f32 %v1896, %v1805
        %v1943 = vmul.f32 %v1896, %v1807
        %v1944 = vmul.f32 %v1896, %v1809
        %v1945 = vmul.f32 %v1896, %v1811
        %v1946 = vmul.f32 %v1896, %v1813
        %v1947 = vmul.f32 %v1896, %v1815
        %v1948 = vmul.f32 %v1896, %v1817
        %v1949 = vmul.f32 %v1896, %v1819
        %v1950 = vmul.f32 %v1896, %v1821
        %v1951 = vmul.f32 %v1896, %v1823
        %v1952 = vmul.f32 %v1896, %v1825
        %v1953 = vmul.f32 %v1900, %v1827
        %v1954 = vmul.f32 %v1900, %v1829
        %v1955 = vmul.f32 %v1900, %v1831
        %v1956 = vmul.f32 %v1900, %v1833
        %v1957 = vmul.f32 %v1900, %v1835
        %v1958 = vmul.f32 %v1900, %v1837
        %v1959 = vmul.f32 %v1900, %v1839
        %v1960 = vmul.f32 %v1900, %v1841
        %v1961 = vmul.f32 %v1900, %v1843
        %v1962 = vmul.f32 %v1900, %v1845
        %v1963 = vmul.f32 %v1900, %v1847
        %v1964 = vmul.f32 %v1900, %v1849
        %v1965 = vmul.f32 %v1900, %v1851
        %v1966 = vmul.f32 %v1900, %v1853
        %v1967 = vmul.f32 %v1900, %v1855
        %v1968 = vmul.f32 %v1900, %v1857
        %1969 = vadd.xlane.f32.xlu0 %v1905
        %v1970 = vpop.xlane.xlu0 %1969
        %1971 = vadd.xlane.f32.xlu0 %v1906
        %v1972 = vpop.xlane.xlu0 %1971
        %1973 = vadd.xlane.f32.xlu0 %v1907
        %v1974 = vpop.xlane.xlu0 %1973
        %1975 = vadd.xlane.f32.xlu0 %v1908
        %v1976 = vpop.xlane.xlu0 %1975
        %1977 = vadd.xlane.f32.xlu0 %v1909
        %v1978 = vpop.xlane.xlu0 %1977
        %1979 = vadd.xlane.f32.xlu0 %v1910
        %v1980 = vpop.xlane.xlu0 %1979
        %1981 = vadd.xlane.f32.xlu0 %v1911
        %v1982 = vpop.xlane.xlu0 %1981
        %1983 = vadd.xlane.f32.xlu0 %v1912
        %v1984 = vpop.xlane.xlu0 %1983
        %1985 = vadd.xlane.f32.xlu0 %v1913
        %v1986 = vpop.xlane.xlu0 %1985
        %1987 = vadd.xlane.f32.xlu0 %v1914
        %v1988 = vpop.xlane.xlu0 %1987
        %1989 = vadd.xlane.f32.xlu0 %v1915
        %v1990 = vpop.xlane.xlu0 %1989
        %1991 = vadd.xlane.f32.xlu0 %v1916
        %v1992 = vpop.xlane.xlu0 %1991
        %1993 = vadd.xlane.f32.xlu0 %v1917
        %v1994 = vpop.xlane.xlu0 %1993
        %1995 = vadd.xlane.f32.xlu0 %v1918
        %v1996 = vpop.xlane.xlu0 %1995
        %1997 = vadd.xlane.f32.xlu0 %v1919
        %v1998 = vpop.xlane.xlu0 %1997
        %1999 = vadd.xlane.f32.xlu0 %v1920
        %v2000 = vpop.xlane.xlu0 %1999
        %2001 = vadd.xlane.f32.xlu0 %v1921
        %v2002 = vpop.xlane.xlu0 %2001
        %2003 = vadd.xlane.f32.xlu0 %v1922
        %v2004 = vpop.xlane.xlu0 %2003
        %2005 = vadd.xlane.f32.xlu0 %v1923
        %v2006 = vpop.xlane.xlu0 %2005
        %2007 = vadd.xlane.f32.xlu0 %v1924
        %v2008 = vpop.xlane.xlu0 %2007
        %2009 = vadd.xlane.f32.xlu0 %v1925
        %v2010 = vpop.xlane.xlu0 %2009
        %2011 = vadd.xlane.f32.xlu0 %v1926
        %v2012 = vpop.xlane.xlu0 %2011
        %2013 = vadd.xlane.f32.xlu0 %v1927
        %v2014 = vpop.xlane.xlu0 %2013
        %2015 = vadd.xlane.f32.xlu0 %v1928
        %v2016 = vpop.xlane.xlu0 %2015
        %2017 = vadd.xlane.f32.xlu0 %v1929
        %v2018 = vpop.xlane.xlu0 %2017
        %2019 = vadd.xlane.f32.xlu0 %v1930
        %v2020 = vpop.xlane.xlu0 %2019
        %2021 = vadd.xlane.f32.xlu0 %v1931
        %v2022 = vpop.xlane.xlu0 %2021
        %2023 = vadd.xlane.f32.xlu0 %v1932
        %v2024 = vpop.xlane.xlu0 %2023
        %2025 = vadd.xlane.f32.xlu0 %v1933
        %v2026 = vpop.xlane.xlu0 %2025
        %2027 = vadd.xlane.f32.xlu0 %v1934
        %v2028 = vpop.xlane.xlu0 %2027
        %2029 = vadd.xlane.f32.xlu0 %v1935
        %v2030 = vpop.xlane.xlu0 %2029
        %2031 = vadd.xlane.f32.xlu0 %v1936
        %v2032 = vpop.xlane.xlu0 %2031
        %2033 = vadd.xlane.f32.xlu0 %v1937
        %v2034 = vpop.xlane.xlu0 %2033
        %2035 = vadd.xlane.f32.xlu0 %v1938
        %v2036 = vpop.xlane.xlu0 %2035
        %2037 = vadd.xlane.f32.xlu0 %v1939
        %v2038 = vpop.xlane.xlu0 %2037
        %2039 = vadd.xlane.f32.xlu0 %v1940
        %v2040 = vpop.xlane.xlu0 %2039
        %2041 = vadd.xlane.f32.xlu0 %v1941
        %v2042 = vpop.xlane.xlu0 %2041
        %2043 = vadd.xlane.f32.xlu0 %v1942
        %v2044 = vpop.xlane.xlu0 %2043
        %2045 = vadd.xlane.f32.xlu0 %v1943
        %v2046 = vpop.xlane.xlu0 %2045
        %2047 = vadd.xlane.f32.xlu0 %v1944
        %v2048 = vpop.xlane.xlu0 %2047
        %2049 = vadd.xlane.f32.xlu0 %v1945
        %v2050 = vpop.xlane.xlu0 %2049
        %2051 = vadd.xlane.f32.xlu0 %v1946
        %v2052 = vpop.xlane.xlu0 %2051
        %2053 = vadd.xlane.f32.xlu0 %v1947
        %v2054 = vpop.xlane.xlu0 %2053
        %2055 = vadd.xlane.f32.xlu0 %v1948
        %v2056 = vpop.xlane.xlu0 %2055
        %2057 = vadd.xlane.f32.xlu0 %v1949
        %v2058 = vpop.xlane.xlu0 %2057
        %2059 = vadd.xlane.f32.xlu0 %v1950
        %v2060 = vpop.xlane.xlu0 %2059
        %2061 = vadd.xlane.f32.xlu0 %v1951
        %v2062 = vpop.xlane.xlu0 %2061
        %2063 = vadd.xlane.f32.xlu0 %v1952
        %v2064 = vpop.xlane.xlu0 %2063
        %2065 = vadd.xlane.f32.xlu0 %v1953
        %v2066 = vpop.xlane.xlu0 %2065
        %2067 = vadd.xlane.f32.xlu0 %v1954
        %v2068 = vpop.xlane.xlu0 %2067
        %2069 = vadd.xlane.f32.xlu0 %v1955
        %v2070 = vpop.xlane.xlu0 %2069
        %2071 = vadd.xlane.f32.xlu0 %v1956
        %v2072 = vpop.xlane.xlu0 %2071
        %2073 = vadd.xlane.f32.xlu0 %v1957
        %v2074 = vpop.xlane.xlu0 %2073
        %2075 = vadd.xlane.f32.xlu0 %v1958
        %v2076 = vpop.xlane.xlu0 %2075
        %2077 = vadd.xlane.f32.xlu0 %v1959
        %v2078 = vpop.xlane.xlu0 %2077
        %2079 = vadd.xlane.f32.xlu0 %v1960
        %v2080 = vpop.xlane.xlu0 %2079
        %2081 = vadd.xlane.f32.xlu0 %v1961
        %v2082 = vpop.xlane.xlu0 %2081
        %2083 = vadd.xlane.f32.xlu0 %v1962
        %v2084 = vpop.xlane.xlu0 %2083
        %2085 = vadd.xlane.f32.xlu0 %v1963
        %v2086 = vpop.xlane.xlu0 %2085
        %2087 = vadd.xlane.f32.xlu0 %v1964
        %v2088 = vpop.xlane.xlu0 %2087
        %2089 = vadd.xlane.f32.xlu0 %v1965
        %v2090 = vpop.xlane.xlu0 %2089
        %2091 = vadd.xlane.f32.xlu0 %v1966
        %v2092 = vpop.xlane.xlu0 %2091
        %2093 = vadd.xlane.f32.xlu0 %v1967
        %v2094 = vpop.xlane.xlu0 %2093
        %2095 = vadd.xlane.f32.xlu0 %v1968
        %v2096 = vpop.xlane.xlu0 %2095
        %s2097 = scalar_lea.vmem %s316, 4 [#allocation8]
        %v2098 = vld [vmem:[%s2097] sm:$0xf]
        %v2163 = vlaneseq
        %v2164 = vshrl.u32 %v2163, 7
        %v2165 = vsub.s32 %v1286, %v2164
        %v2166 = vrot.slane %v1970, %v2165
        %v2167 = vlaneseq
        %v2168 = vshrl.u32 %v2167, 7
        %v2169 = vsub.s32 %v1291, %v2168
        %v2170 = vrot.slane %v1972, %v2169
        %v2171 = vsel %vm1296, %v2170, %v2166
        %v2172 = vlaneseq
        %v2173 = vshrl.u32 %v2172, 7
        %v2174 = vsub.s32 %v1298, %v2173
        %v2175 = vrot.slane %v1974, %v2174
        %v2176 = vsel %vm1303, %v2175, %v2171
        %v2177 = vlaneseq
        %v2178 = vshrl.u32 %v2177, 7
        %v2179 = vsub.s32 %v1305, %v2178
        %v2180 = vrot.slane %v1976, %v2179
        %v2181 = vsel %vm1310, %v2180, %v2176
        %v2182 = vlaneseq
        %v2183 = vshrl.u32 %v2182, 7
        %v2184 = vsub.s32 %v1312, %v2183
        %v2185 = vrot.slane %v1978, %v2184
        %v2186 = vsel %vm1317, %v2185, %v2181
        %v2187 = vlaneseq
        %v2188 = vshrl.u32 %v2187, 7
        %v2189 = vsub.s32 %v1319, %v2188
        %v2190 = vrot.slane %v1980, %v2189
        %v2191 = vsel %vm1324, %v2190, %v2186
        %v2192 = vlaneseq
        %v2193 = vshrl.u32 %v2192, 7
        %v2194 = vsub.s32 %v1326, %v2193
        %v2195 = vrot.slane %v1982, %v2194
        %v2196 = vsel %vm1331, %v2195, %v2191
        %v2197 = vlaneseq
        %v2198 = vshrl.u32 %v2197, 7
        %v2199 = vsub.s32 %v1333, %v2198
        %v2200 = vrot.slane %v1984, %v2199
        %v2201 = vsel %vm1338, %v2200, %v2196
        %v2202 = vlaneseq
        %v2203 = vshrl.u32 %v2202, 7
        %v2204 = vsub.s32 %v1340, %v2203
        %v2205 = vrot.slane %v1986, %v2204
        %v2206 = vsel %vm1345, %v2205, %v2201
        %v2207 = vlaneseq
        %v2208 = vshrl.u32 %v2207, 7
        %v2209 = vsub.s32 %v1347, %v2208
        %v2210 = vrot.slane %v1988, %v2209
        %v2211 = vsel %vm1352, %v2210, %v2206
        %v2212 = vlaneseq
        %v2213 = vshrl.u32 %v2212, 7
        %v2214 = vsub.s32 %v1354, %v2213
        %v2215 = vrot.slane %v1990, %v2214
        %v2216 = vsel %vm1359, %v2215, %v2211
        %v2217 = vlaneseq
        %v2218 = vshrl.u32 %v2217, 7
        %v2219 = vsub.s32 %v1361, %v2218
        %v2220 = vrot.slane %v1992, %v2219
        %v2221 = vsel %vm1366, %v2220, %v2216
        %v2222 = vlaneseq
        %v2223 = vshrl.u32 %v2222, 7
        %v2224 = vsub.s32 %v1368, %v2223
        %v2225 = vrot.slane %v1994, %v2224
        %v2226 = vsel %vm1373, %v2225, %v2221
        %v2227 = vlaneseq
        %v2228 = vshrl.u32 %v2227, 7
        %v2229 = vsub.s32 %v1375, %v2228
        %v2230 = vrot.slane %v1996, %v2229
        %v2231 = vsel %vm1380, %v2230, %v2226
        %v2232 = vlaneseq
        %v2233 = vshrl.u32 %v2232, 7
        %v2234 = vsub.s32 %v1382, %v2233
        %v2235 = vrot.slane %v1998, %v2234
        %v2236 = vsel %vm1387, %v2235, %v2231
        %v2237 = vlaneseq
        %v2238 = vshrl.u32 %v2237, 7
        %v2239 = vsub.s32 %v1389, %v2238
        %v2240 = vrot.slane %v2000, %v2239
        %v2241 = vsel %vm1394, %v2240, %v2236
        %v2242 = vlaneseq
        %v2243 = vshrl.u32 %v2242, 7
        %v2244 = vsub.s32 %v1286, %v2243
        %v2245 = vrot.slane %v2002, %v2244
        %v2246 = vlaneseq
        %v2247 = vshrl.u32 %v2246, 7
        %v2248 = vsub.s32 %v1291, %v2247
        %v2249 = vrot.slane %v2004, %v2248
        %v2250 = vsel %vm1296, %v2249, %v2245
        %v2251 = vlaneseq
        %v2252 = vshrl.u32 %v2251, 7
        %v2253 = vsub.s32 %v1298, %v2252
        %v2254 = vrot.slane %v2006, %v2253
        %v2255 = vsel %vm1303, %v2254, %v2250
        %v2256 = vlaneseq
        %v2257 = vshrl.u32 %v2256, 7
        %v2258 = vsub.s32 %v1305, %v2257
        %v2259 = vrot.slane %v2008, %v2258
        %v2260 = vsel %vm1310, %v2259, %v2255
        %v2261 = vlaneseq
        %v2262 = vshrl.u32 %v2261, 7
        %v2263 = vsub.s32 %v1312, %v2262
        %v2264 = vrot.slane %v2010, %v2263
        %v2265 = vsel %vm1317, %v2264, %v2260
        %v2266 = vlaneseq
        %v2267 = vshrl.u32 %v2266, 7
        %v2268 = vsub.s32 %v1319, %v2267
        %v2269 = vrot.slane %v2012, %v2268
        %v2270 = vsel %vm1324, %v2269, %v2265
        %v2271 = vlaneseq
        %v2272 = vshrl.u32 %v2271, 7
        %v2273 = vsub.s32 %v1326, %v2272
        %v2274 = vrot.slane %v2014, %v2273
        %v2275 = vsel %vm1331, %v2274, %v2270
        %v2276 = vlaneseq
        %v2277 = vshrl.u32 %v2276, 7
        %v2278 = vsub.s32 %v1333, %v2277
        %v2279 = vrot.slane %v2016, %v2278
        %v2280 = vsel %vm1338, %v2279, %v2275
        %v2281 = vlaneseq
        %v2282 = vshrl.u32 %v2281, 7
        %v2283 = vsub.s32 %v1340, %v2282
        %v2284 = vrot.slane %v2018, %v2283
        %v2285 = vsel %vm1345, %v2284, %v2280
        %v2286 = vlaneseq
        %v2287 = vshrl.u32 %v2286, 7
        %v2288 = vsub.s32 %v1347, %v2287
        %v2289 = vrot.slane %v2020, %v2288
        %v2290 = vsel %vm1352, %v2289, %v2285
        %v2291 = vlaneseq
        %v2292 = vshrl.u32 %v2291, 7
        %v2293 = vsub.s32 %v1354, %v2292
        %v2294 = vrot.slane %v2022, %v2293
        %v2295 = vsel %vm1359, %v2294, %v2290
        %v2296 = vlaneseq
        %v2297 = vshrl.u32 %v2296, 7
        %v2298 = vsub.s32 %v1361, %v2297
        %v2299 = vrot.slane %v2024, %v2298
        %v2300 = vsel %vm1366, %v2299, %v2295
        %v2301 = vlaneseq
        %v2302 = vshrl.u32 %v2301, 7
        %v2303 = vsub.s32 %v1368, %v2302
        %v2304 = vrot.slane %v2026, %v2303
        %v2305 = vsel %vm1373, %v2304, %v2300
        %v2306 = vlaneseq
        %v2307 = vshrl.u32 %v2306, 7
        %v2308 = vsub.s32 %v1375, %v2307
        %v2309 = vrot.slane %v2028, %v2308
        %v2310 = vsel %vm1380, %v2309, %v2305
        %v2311 = vlaneseq
        %v2312 = vshrl.u32 %v2311, 7
        %v2313 = vsub.s32 %v1382, %v2312
        %v2314 = vrot.slane %v2030, %v2313
        %v2315 = vsel %vm1387, %v2314, %v2310
        %v2316 = vlaneseq
        %v2317 = vshrl.u32 %v2316, 7
        %v2318 = vsub.s32 %v1389, %v2317
        %v2319 = vrot.slane %v2032, %v2318
        %v2320 = vsel %vm1394, %v2319, %v2315
        %v2321 = vlaneseq
        %v2322 = vshrl.u32 %v2321, 7
        %v2323 = vsub.s32 %v1286, %v2322
        %v2324 = vrot.slane %v2034, %v2323
        %v2325 = vlaneseq
        %v2326 = vshrl.u32 %v2325, 7
        %v2327 = vsub.s32 %v1291, %v2326
        %v2328 = vrot.slane %v2036, %v2327
        %v2329 = vsel %vm1296, %v2328, %v2324
        %v2330 = vlaneseq
        %v2331 = vshrl.u32 %v2330, 7
        %v2332 = vsub.s32 %v1298, %v2331
        %v2333 = vrot.slane %v2038, %v2332
        %v2334 = vsel %vm1303, %v2333, %v2329
        %v2335 = vlaneseq
        %v2336 = vshrl.u32 %v2335, 7
        %v2337 = vsub.s32 %v1305, %v2336
        %v2338 = vrot.slane %v2040, %v2337
        %v2339 = vsel %vm1310, %v2338, %v2334
        %v2340 = vlaneseq
        %v2341 = vshrl.u32 %v2340, 7
        %v2342 = vsub.s32 %v1312, %v2341
        %v2343 = vrot.slane %v2042, %v2342
        %v2344 = vsel %vm1317, %v2343, %v2339
        %v2345 = vlaneseq
        %v2346 = vshrl.u32 %v2345, 7
        %v2347 = vsub.s32 %v1319, %v2346
        %v2348 = vrot.slane %v2044, %v2347
        %v2349 = vsel %vm1324, %v2348, %v2344
        %v2350 = vlaneseq
        %v2351 = vshrl.u32 %v2350, 7
        %v2352 = vsub.s32 %v1326, %v2351
        %v2353 = vrot.slane %v2046, %v2352
        %v2354 = vsel %vm1331, %v2353, %v2349
        %v2355 = vlaneseq
        %v2356 = vshrl.u32 %v2355, 7
        %v2357 = vsub.s32 %v1333, %v2356
        %v2358 = vrot.slane %v2048, %v2357
        %v2359 = vsel %vm1338, %v2358, %v2354
        %v2360 = vlaneseq
        %v2361 = vshrl.u32 %v2360, 7
        %v2362 = vsub.s32 %v1340, %v2361
        %v2363 = vrot.slane %v2050, %v2362
        %v2364 = vsel %vm1345, %v2363, %v2359
        %v2365 = vlaneseq
        %v2366 = vshrl.u32 %v2365, 7
        %v2367 = vsub.s32 %v1347, %v2366
        %v2368 = vrot.slane %v2052, %v2367
        %v2369 = vsel %vm1352, %v2368, %v2364
        %v2370 = vlaneseq
        %v2371 = vshrl.u32 %v2370, 7
        %v2372 = vsub.s32 %v1354, %v2371
        %v2373 = vrot.slane %v2054, %v2372
        %v2374 = vsel %vm1359, %v2373, %v2369
        %v2375 = vlaneseq
        %v2376 = vshrl.u32 %v2375, 7
        %v2377 = vsub.s32 %v1361, %v2376
        %v2378 = vrot.slane %v2056, %v2377
        %v2379 = vsel %vm1366, %v2378, %v2374
        %v2380 = vlaneseq
        %v2381 = vshrl.u32 %v2380, 7
        %v2382 = vsub.s32 %v1368, %v2381
        %v2383 = vrot.slane %v2058, %v2382
        %v2384 = vsel %vm1373, %v2383, %v2379
        %v2385 = vlaneseq
        %v2386 = vshrl.u32 %v2385, 7
        %v2387 = vsub.s32 %v1375, %v2386
        %v2388 = vrot.slane %v2060, %v2387
        %v2389 = vsel %vm1380, %v2388, %v2384
        %v2390 = vlaneseq
        %v2391 = vshrl.u32 %v2390, 7
        %v2392 = vsub.s32 %v1382, %v2391
        %v2393 = vrot.slane %v2062, %v2392
        %v2394 = vsel %vm1387, %v2393, %v2389
        %v2395 = vlaneseq
        %v2396 = vshrl.u32 %v2395, 7
        %v2397 = vsub.s32 %v1389, %v2396
        %v2398 = vrot.slane %v2064, %v2397
        %v2399 = vsel %vm1394, %v2398, %v2394
        %v2400 = vlaneseq
        %v2401 = vshrl.u32 %v2400, 7
        %v2402 = vsub.s32 %v1286, %v2401
        %v2403 = vrot.slane %v2066, %v2402
        %v2404 = vlaneseq
        %v2405 = vshrl.u32 %v2404, 7
        %v2406 = vsub.s32 %v1291, %v2405
        %v2407 = vrot.slane %v2068, %v2406
        %v2408 = vsel %vm1296, %v2407, %v2403
        %v2409 = vlaneseq
        %v2410 = vshrl.u32 %v2409, 7
        %v2411 = vsub.s32 %v1298, %v2410
        %v2412 = vrot.slane %v2070, %v2411
        %v2413 = vsel %vm1303, %v2412, %v2408
        %v2414 = vlaneseq
        %v2415 = vshrl.u32 %v2414, 7
        %v2416 = vsub.s32 %v1305, %v2415
        %v2417 = vrot.slane %v2072, %v2416
        %v2418 = vsel %vm1310, %v2417, %v2413
        %v2419 = vlaneseq
        %v2420 = vshrl.u32 %v2419, 7
        %v2421 = vsub.s32 %v1312, %v2420
        %v2422 = vrot.slane %v2074, %v2421
        %v2423 = vsel %vm1317, %v2422, %v2418
        %v2424 = vlaneseq
        %v2425 = vshrl.u32 %v2424, 7
        %v2426 = vsub.s32 %v1319, %v2425
        %v2427 = vrot.slane %v2076, %v2426
        %v2428 = vsel %vm1324, %v2427, %v2423
        %v2429 = vlaneseq
        %v2430 = vshrl.u32 %v2429, 7
        %v2431 = vsub.s32 %v1326, %v2430
        %v2432 = vrot.slane %v2078, %v2431
        %v2433 = vsel %vm1331, %v2432, %v2428
        %v2434 = vlaneseq
        %v2435 = vshrl.u32 %v2434, 7
        %v2436 = vsub.s32 %v1333, %v2435
        %v2437 = vrot.slane %v2080, %v2436
        %v2438 = vsel %vm1338, %v2437, %v2433
        %v2439 = vlaneseq
        %v2440 = vshrl.u32 %v2439, 7
        %v2441 = vsub.s32 %v1340, %v2440
        %v2442 = vrot.slane %v2082, %v2441
        %v2443 = vsel %vm1345, %v2442, %v2438
        %v2444 = vlaneseq
        %v2445 = vshrl.u32 %v2444, 7
        %v2446 = vsub.s32 %v1347, %v2445
        %v2447 = vrot.slane %v2084, %v2446
        %v2448 = vsel %vm1352, %v2447, %v2443
        %v2449 = vlaneseq
        %v2450 = vshrl.u32 %v2449, 7
        %v2451 = vsub.s32 %v1354, %v2450
        %v2452 = vrot.slane %v2086, %v2451
        %v2453 = vsel %vm1359, %v2452, %v2448
        %v2454 = vlaneseq
        %v2455 = vshrl.u32 %v2454, 7
        %v2456 = vsub.s32 %v1361, %v2455
        %v2457 = vrot.slane %v2088, %v2456
        %v2458 = vsel %vm1366, %v2457, %v2453
        %v2459 = vlaneseq
        %v2460 = vshrl.u32 %v2459, 7
        %v2461 = vsub.s32 %v1368, %v2460
        %v2462 = vrot.slane %v2090, %v2461
        %v2463 = vsel %vm1373, %v2462, %v2458
        %v2464 = vlaneseq
        %v2465 = vshrl.u32 %v2464, 7
        %v2466 = vsub.s32 %v1375, %v2465
        %v2467 = vrot.slane %v2092, %v2466
        %v2468 = vsel %vm1380, %v2467, %v2463
        %v2469 = vlaneseq
        %v2470 = vshrl.u32 %v2469, 7
        %v2471 = vsub.s32 %v1382, %v2470
        %v2472 = vrot.slane %v2094, %v2471
        %v2473 = vsel %vm1387, %v2472, %v2468
        %v2474 = vlaneseq
        %v2475 = vshrl.u32 %v2474, 7
        %v2476 = vsub.s32 %v1389, %v2475
        %v2477 = vrot.slane %v2096, %v2476
        %v2478 = vsel %vm1394, %v2477, %v2473
        %v2479 = vsel %vm1633, %v2320, %v2241
        %v2480 = vsel %vm1635, %v2399, %v2479
        %v2481 = vsel %vm1637, %v2478, %v2480
        %v2483 = vadd.f32 %v2098, %v2481
        %2484 = vst [vmem:[%s2097] sm:$0xf] %v2483
        %s2485 = sand.u32 %s158, 1
        %s2486 = scalar_lea.sflag [#allocation4], %s2485
        %s2487 = sand.u32 %s158, 1
        %s2488 = smul.addr %s2487, 8
        %s2489 = scalar_lea.vmem [#allocation8], %s2488
        // Predicated region
        $region53: #{tpu_custom_call.1} parent=35 // pred_check
          %p2490 = pneg %p168
        $region54: #{tpu_custom_call.1} parent=35 // pred_check_branch
          %2492 = sbr.rel (%p2490) target = $region56
        $region55: #{tpu_custom_call.1} parent=35 // pred_region
          %s2494 = ssub.s32 128, 128
          %2495 = vsyncadd %s2486, %s2494
          %s2496 = smul.addr %s29, 2
          %s2497 = sadd.s32 %s30, %s2496
          %s2498 = smul.addr %s2497, 64
          %s2499 = scalar_lea.hbm %s4, %s2498
          %s2500 = sshll.u32 %s2489, 4
          %s2501 = int_to_ptr.vmem [resolvable:$true] %s2500
          %2506 = dma.vmem_to_hbm [thread:$0]  %s2501, 128, %s2499, %s2486, 64, 64, 4
        $region56: #{tpu_custom_call.1} parent=35 // pred_fallthru
          _
      $region36: #{tpu_custom_call.1} parent=5 // pred_fallthru
        _
      %p2507 = scmp.le.s32.totalorder 2, %s19
      // Predicated region
      $region57: #{tpu_custom_call.1} parent=5 // pred_check
        %p2508 = pneg %p2507
      $region58: #{tpu_custom_call.1} parent=5 // pred_check_branch
        %2510 = sbr.rel (%p2508) target = $region60
      $region59: #{tpu_custom_call.1} parent=5 // pred_region
        %s2511 = ssub.s32 %s19, 2
        // Predicated region
        $region61: #{tpu_custom_call.1} parent=59 // pred_check
          %p2512 = pneg %p174
        $region62: #{tpu_custom_call.1} parent=59 // pred_check_branch
          %2514 = sbr.rel (%p2512) target = $region64
        $region63: #{tpu_custom_call.1} parent=59 // pred_region
          %s2515 = sand.u32 %s159, 1
          %s2516 = scalar_lea.sflag [#allocation4], %s2515
          %s2517 = sand.u32 %s159, 1
          %s2518 = smul.addr %s2517, 8
          %s2519 = scalar_lea.vmem [#allocation8], %s2518
          %2520 = dma.done %s2516, 128
        $region64: #{tpu_custom_call.1} parent=59 // pred_fallthru
          _
      $region60: #{tpu_custom_call.1} parent=5 // pred_fallthru
        _
    $region6: #{tpu_custom_call.1} parent=1 // loop_footer
      %s23 = sadd.s32 1, %s19
    $region7: #{tpu_custom_call.1} parent=1 // loop_footer_branch
      %18 = sbr.rel target = $region3
    $region8: #{tpu_custom_call.1} parent=1 // loop_exit
      _
    %2521 = vsyncpa [#allocation3], 1
    %s2522 = scalar_lea.sflag [#allocation3], 1
    %2523 = vsyncpa %s2522, 1
    %2524 = vsyncpa [#allocation6], 1
    %s2525 = scalar_lea.sflag [#allocation6], 1
    %2526 = vsyncpa %s2525, 1
    %2527 = vsyncpa [#allocation4], 1
    %s2528 = scalar_lea.sflag [#allocation4], 1
    %2529 = vsyncpa %s2528, 1

</llo_original>
